<compile_context>
chip_gen: v5e
topology: v5e:2x2
jax: 0.10.0
libtpu: 0.0.40
codegen_flags: <defaults>
</compile_context>

<pallas_src>
import functools

import jax
import jax.numpy as jnp
from jax.experimental import pallas as pl
from jax.experimental.pallas import tpu as pltpu


# ------------------------------------------------------------------ halo zeroing
def _zero_halo(pad_ref, *, H, W, Cm):
    """Zero only the halo ring of the padded scratch (aligned stores).

    The valid data is written to pad_ref[1:H+1, 8:8+W] each step; the 3x3 windows
    read columns [7, W+9) and rows [0, H+2), so only rows 0/H+1 and the 8-wide
    column strips containing columns 7 and W+8 need to be zero.  Zeroed every grid
    step (cheap, ~fraction of one interior store) so correctness does not depend on
    per-core scratch having seen program_id 0 (megacore-safe).
    """
    zrow = jnp.zeros((1, W + 16, Cm), jnp.float32)
    pad_ref[0:1, :, :] = zrow
    pad_ref[H + 1:H + 2, :, :] = zrow
    zcol = jnp.zeros((H + 2, 8, Cm), jnp.float32)
    pad_ref[:, 0:8, :] = zcol
    pad_ref[:, W + 8:W + 16, :] = zcol


# --------------------------------------------------------------- 3x3 conv core
def _build_slab(pad_ref, slab_ref, merged_f32, *, H, W, Cm):
    """Store merged map into the padded scratch and build the column-concat slab.

    slab[r, c, kw*Cm:(kw+1)*Cm] == zero_padded(merged)[r, c + kw].  The interior
    store (column offset 8, width W) is sublane-aligned; the three kw-shifted reads
    (offsets 7/8/9) are hoisted out of the kh loop and done exactly once.
    """
    pad_ref[1:H + 1, 8:8 + W, :] = merged_f32
    for kw in range(3):
        slab_ref[:, :, kw * Cm:(kw + 1) * Cm] = (
            pad_ref[:, 7 + kw:7 + kw + W, :].astype(slab_ref.dtype))


def _conv3x3(slab_ref, ow_ref, ob, out_ref, *, H, W, Cm):
    """'Same' 3x3 conv: three K=3*Cm bf16 MXU matmuls (one per kh), f32 accumulate.

    kh offsets are leading-dim slices of the slab (layout-free); bias is folded
    into the first tap so there is no separate full-size add pass.
    """
    HW = H * W

    def lhs(kh):
        return slab_ref[kh:kh + H, :, :].reshape(HW, 3 * Cm).astype(jnp.bfloat16)

    acc = jnp.dot(lhs(0), ow_ref[0], preferred_element_type=jnp.float32) + ob
    acc = acc + jnp.dot(lhs(1), ow_ref[1], preferred_element_type=jnp.float32)
    acc = acc + jnp.dot(lhs(2), ow_ref[2], preferred_element_type=jnp.float32)
    out_ref[0] = acc.astype(out_ref.dtype)


# ------------------------------------------------------------- top pyramid level
def _fpn_top_kernel(x_ref, lw_ref, lb_ref, ow_ref, ob_ref,
                    lat_ref, out_ref, pad_ref, slab_ref, *, H, W, Cm):
    _zero_halo(pad_ref, H=H, W=W, Cm=Cm)
    # 1x1 lateral conv as one GEMM, bf16 MXU operands / f32 accumulation.
    lateral = jnp.dot(x_ref[0].astype(jnp.bfloat16), lw_ref[...],
                      preferred_element_type=jnp.float32) + lb_ref[...]
    lat3 = lateral.reshape(H, W, Cm)
    lat_ref[0] = lat3.astype(lat_ref.dtype)            # top-down carry (f32)
    _build_slab(pad_ref, slab_ref, lat3, H=H, W=W, Cm=Cm)
    _conv3x3(slab_ref, ow_ref, ob_ref[...], out_ref, H=H, W=W, Cm=Cm)


# ------------------------------------------- fused lateral + upsample-add + conv
def _fpn_level_kernel(x_ref, lw_ref, lb_ref, c_ref, sel_ref, ow_ref, ob_ref,
                      *rest, H, W, h, w, Cm, emit_carry):
    if emit_carry:
        ups_ref, out_ref, pad_ref, slab_ref = rest
    else:
        out_ref, pad_ref, slab_ref = rest
        ups_ref = None

    _zero_halo(pad_ref, H=H, W=W, Cm=Cm)

    # (a) 1x1 lateral conv as one GEMM (bf16 MXU, f32 accumulate).
    lateral = jnp.dot(x_ref[0].astype(jnp.bfloat16), lw_ref[...],
                      preferred_element_type=jnp.float32) + lb_ref[...]
    lat3 = lateral.reshape(H, W, Cm)

    # (b) nearest-neighbour upsample of the coarse map.
    #     Columns: exact 0/1 selection matmul in f32 (keeps the carry exact),
    #     batched over the h source rows; the (W, w) matrix is broadcast in-kernel.
    sel = jnp.broadcast_to(sel_ref[...][None], (h, W, w))
    up_cols = jax.lax.dot_general(
        sel, c_ref[0], dimension_numbers=(((2,), (1,)), ((0,), (0,))),
        preferred_element_type=jnp.float32)                      # (h, W, Cm)
    #     Rows: duplicate each source row via leading-dim broadcast + reshape.
    if H % h == 0:
        fr = H // h
        up = jnp.broadcast_to(up_cols[:, None], (h, fr, W, Cm)).reshape(H, W, Cm)
    else:
        # TODO(synk): trace-heavy general floor(dst*in/out) row mapping; replace
        # with a selection matmul if non-integer row factors are ever exercised.
        rows = [(ro * h) // H for ro in range(H)]
        up = jnp.concatenate([up_cols[r][None] for r in rows], axis=0)

    # (c) top-down merge (f32 on the VPU); carry stored only when consumed.
    merged = up + lat3
    if emit_carry:
        ups_ref[0] = merged.astype(ups_ref.dtype)

    # (d) fused 3x3 output conv on the merged map.
    _build_slab(pad_ref, slab_ref, merged, H=H, W=W, Cm=Cm)
    _conv3x3(slab_ref, ow_ref, ob_ref[...], out_ref, H=H, W=W, Cm=Cm)


# --------------------------------------------------------------------- wrappers
def _slab_dtype(W):
    # bf16 slab halves the conv-LHS traffic; fall back to f32 when W is not a
    # multiple of the bf16 sublane packing (16) so every reshape stays layout-free.
    return jnp.bfloat16 if W % 16 == 0 else jnp.float32


def fpn_top_level(x_nhwc, lat_w, lat_b, out_w, out_b):
    """Top level: lateral 1x1 + 3x3 output conv.  Returns (lateral_map, pyramid_out)."""
    N, H, W, Cin = x_nhwc.shape
    Cm = lat_w.shape[1]
    assert W % 8 == 0, "W must be a multiple of 8 (sublane-aligned flatten)"
    x_flat = x_nhwc.reshape(N, H * W, Cin)
    ow = out_w.reshape(3, 3 * Cm, Cm)        # (kh, kw*Cm+ci, co) for K=3*Cm matmuls
    kernel = functools.partial(_fpn_top_kernel, H=H, W=W, Cm=Cm)
    lat, out = pl.pallas_call(
        kernel,
        out_shape=(jax.ShapeDtypeStruct((N, H, W, Cm), x_nhwc.dtype),
                   jax.ShapeDtypeStruct((N, H * W, Cm), x_nhwc.dtype)),
        grid=(N,),
        in_specs=[
            pl.BlockSpec((1, H * W, Cin), lambda n: (n, 0, 0)),
            pl.BlockSpec((Cin, Cm), lambda n: (0, 0)),
            pl.BlockSpec((1, Cm), lambda n: (0, 0)),
            pl.BlockSpec((3, 3 * Cm, Cm), lambda n: (0, 0, 0)),
            pl.BlockSpec((1, Cm), lambda n: (0, 0)),
        ],
        out_specs=(pl.BlockSpec((1, H, W, Cm), lambda n: (n, 0, 0, 0)),
                   pl.BlockSpec((1, H * W, Cm), lambda n: (n, 0, 0))),
        scratch_shapes=[pltpu.VMEM((H + 2, W + 16, Cm), jnp.float32),
                        pltpu.VMEM((H + 2, W, 3 * Cm), _slab_dtype(W))],
        compiler_params=pltpu.CompilerParams(dimension_semantics=("parallel",)),
    )(x_flat, lat_w, lat_b.reshape(1, Cm), ow, out_b.reshape(1, Cm))
    return lat, out.reshape(N, H, W, Cm)


def fpn_level(x_nhwc, coarse_nhwc, lat_w, lat_b, out_w, out_b, *, emit_carry):
    """One fused level: lateral 1x1 + upsample(coarse)+add + 3x3 output conv.

    Returns (merged_map_or_None, pyramid_out); the merged map is the next level's
    coarse input and is only emitted when emit_carry=True.
    """
    N, H, W, Cin = x_nhwc.shape
    _, h, w, Cm = coarse_nhwc.shape
    assert W % 8 == 0, "W must be a multiple of 8 (sublane-aligned flatten)"
    x_flat = x_nhwc.reshape(N, H * W, Cin)
    ow = out_w.reshape(3, 3 * Cm, Cm)
    # Nearest-neighbour column map src = floor(dst*w/W) as a tiny 2-D 0/1 matrix.
    col_src = (jnp.arange(W) * w) // W
    sel = (col_src[:, None] == jnp.arange(w)[None, :]).astype(jnp.float32)   # (W, w)

    kernel = functools.partial(_fpn_level_kernel, H=H, W=W, h=h, w=w, Cm=Cm,
                               emit_carry=emit_carry)
    if emit_carry:
        out_shape = (jax.ShapeDtypeStruct((N, H, W, Cm), x_nhwc.dtype),
                     jax.ShapeDtypeStruct((N, H * W, Cm), x_nhwc.dtype))
        out_specs = (pl.BlockSpec((1, H, W, Cm), lambda n: (n, 0, 0, 0)),
                     pl.BlockSpec((1, H * W, Cm), lambda n: (n, 0, 0)))
    else:
        out_shape = jax.ShapeDtypeStruct((N, H * W, Cm), x_nhwc.dtype)
        out_specs = pl.BlockSpec((1, H * W, Cm), lambda n: (n, 0, 0))

    res = pl.pallas_call(
        kernel,
        out_shape=out_shape,
        grid=(N,),
        in_specs=[
            pl.BlockSpec((1, H * W, Cin), lambda n: (n, 0, 0)),
            pl.BlockSpec((Cin, Cm), lambda n: (0, 0)),
            pl.BlockSpec((1, Cm), lambda n: (0, 0)),
            pl.BlockSpec((1, h, w, Cm), lambda n: (n, 0, 0, 0)),
            pl.BlockSpec((W, w), lambda n: (0, 0)),
            pl.BlockSpec((3, 3 * Cm, Cm), lambda n: (0, 0, 0)),
            pl.BlockSpec((1, Cm), lambda n: (0, 0)),
        ],
        out_specs=out_specs,
        scratch_shapes=[pltpu.VMEM((H + 2, W + 16, Cm), jnp.float32),
                        pltpu.VMEM((H + 2, W, 3 * Cm), _slab_dtype(W))],
        compiler_params=pltpu.CompilerParams(dimension_semantics=("parallel",)),
    )(x_flat, lat_w, lat_b.reshape(1, Cm), coarse_nhwc, sel, ow,
      out_b.reshape(1, Cm))

    if emit_carry:
        ups, out = res
    else:
        ups, out = None, res
    return ups, out.reshape(N, H, W, Cm)


# ------------------------------------------------------------------- FPN module
class FPNFeatureExtractor:
    """Pallas port of the PyTorch FPNFeatureExtractor (forward-pass only)."""

    def __init__(self, in_channels_list, out_channel=256, upsampling_mode="nearest",
                 *, key):
        assert upsampling_mode == "nearest"
        self.out_channel = out_channel
        self.lat_w, self.lat_b, self.out_w, self.out_b = [], [], [], []
        for i, cin in enumerate(in_channels_list):
            k = jax.random.fold_in(key, i)
            k1, k2, k3, k4 = jax.random.split(k, 4)
            # MXU operands stored in bf16 (f32 accumulation in-kernel); biases f32.
            self.lat_w.append(
                (jax.random.normal(k1, (cin, out_channel), jnp.float32)
                 / jnp.sqrt(cin * 1.0)).astype(jnp.bfloat16))
            self.lat_b.append(jax.random.normal(k2, (out_channel,), jnp.float32) * 0.01)
            self.out_w.append(
                (jax.random.normal(k3, (3, 3, out_channel, out_channel), jnp.float32)
                 / jnp.sqrt(9.0 * out_channel)).astype(jnp.bfloat16))
            self.out_b.append(jax.random.normal(k4, (out_channel,), jnp.float32) * 0.01)

    def __call__(self, feature_maps_nchw):
        # NCHW -> NHWC (kernel layout)
        fmaps = [jnp.transpose(f, (0, 2, 3, 1)) for f in feature_maps_nchw]
        L = len(fmaps)
        last, top_out = fpn_top_level(fmaps[-1], self.lat_w[-1], self.lat_b[-1],
                                      self.out_w[-1], self.out_b[-1])
        pyramid = [top_out]
        # TODO(synk): the PyTorch reference reads `latest_feature_map`, undefined on
        # the first loop iteration (spec typo); implemented with the intended running
        # top-down feature, i.e. the standard FPN pathway.
        for i in range(L - 2, -1, -1):
            last, out = fpn_level(fmaps[i], last, self.lat_w[i], self.lat_b[i],
                                  self.out_w[i], self.out_b[i],
                                  emit_carry=(i != 0))
            pyramid.insert(0, out)
        # NHWC -> NCHW to match the PyTorch module's output convention.
        return [jnp.transpose(p, (0, 3, 1, 2)) for p in pyramid]


# -------------------------------------------------------------- pure-JAX reference
def _ref_conv(x_nhwc, w_hwio, b, padding):
    out = jax.lax.conv_general_dilated(
        x_nhwc, w_hwio, window_strides=(1, 1),
        padding=[(padding, padding), (padding, padding)],
        dimension_numbers=("NHWC", "HWIO", "NHWC"),
        preferred_element_type=jnp.float32)
    return out + b.reshape(1, 1, 1, -1)


def _ref_upsample_add(x, y):
    N, h, w, C = x.shape
    _, H, W, _ = y.shape
    rows = (jnp.arange(H) * h) // H
    cols = (jnp.arange(W) * w) // W
    return x[:, rows][:, :, cols] + y


def _ref_forward(fpn, feature_maps_nchw):
    fmaps = [jnp.transpose(f, (0, 2, 3, 1)) for f in feature_maps_nchw]
    L = len(fmaps)
    lw = [w.reshape(1, 1, *w.shape) for w in fpn.lat_w]   # (1,1,Cin,Cm) bf16

    def lat(i, x):
        return _ref_conv(x.astype(jnp.bfloat16), lw[i], fpn.lat_b[i], 0)

    def outc(i, x):
        return _ref_conv(x.astype(jnp.bfloat16), fpn.out_w[i], fpn.out_b[i], 1)

    last = lat(L - 1, fmaps[-1])
    pyramid = [outc(L - 1, last)]
    for i in range(L - 2, -1, -1):
        lateral = lat(i, fmaps[i])
        ups = _ref_upsample_add(last, lateral)
        pyramid.insert(0, outc(i, ups))
        last = ups
    return [jnp.transpose(p, (0, 3, 1, 2)) for p in pyramid]


# ------------------------------------------------------------------------------ main
if __name__ == "__main__":
    key = jax.random.PRNGKey(0)
    in_channels_list = [16, 32, 64]   # fine-to-coarse channel counts
    spatial_sizes = [32, 16, 8]       # matching resolutions (stride-2 pyramid)
    out_channel = 128                 # multiple of 128 -> lane-dense stores
    N = 2

    keys = jax.random.split(key, len(in_channels_list) + 1)
    feature_maps = [
        jax.random.normal(keys[i], (N, c, s, s), jnp.float32)
        for i, (c, s) in enumerate(zip(in_channels_list, spatial_sizes))
    ]

    fpn = FPNFeatureExtractor(in_channels_list, out_channel=out_channel,
                              upsampling_mode="nearest", key=keys[-1])

    outputs = fpn(feature_maps)
    outputs = jax.block_until_ready(outputs)

    # sanity check against a pure-JAX (XLA) reference with matching bf16 quantization
    refs = jax.block_until_ready(_ref_forward(fpn, feature_maps))
    for o, r, s in zip(outputs, refs, spatial_sizes):
        assert o.shape == (N, out_channel, s, s), o.shape
        err = float(jnp.max(jnp.abs(o - r)))
        assert jnp.allclose(o, r, atol=2e-2, rtol=2e-2), err

    print("KERNEL_OK")
</pallas_src>

<mosaic_0001>
module attributes {stable_mosaic.version = 11 : i64} {
  func.func @_fpn_top_kernel(%arg0: i32, %arg1: memref<1x64x64xf32, #tpu.memory_space<vmem>>, %arg2: memref<64x128xbf16, #tpu.memory_space<vmem>>, %arg3: memref<1x128xf32, #tpu.memory_space<vmem>>, %arg4: memref<3x384x128xbf16, #tpu.memory_space<vmem>>, %arg5: memref<1x128xf32, #tpu.memory_space<vmem>>, %arg6: memref<1x8x8x128xf32, #tpu.memory_space<vmem>>, %arg7: memref<1x64x128xf32, #tpu.memory_space<vmem>>, %arg8: memref<10x24x128xf32, #tpu.memory_space<vmem>>, %arg9: memref<10x8x384xf32, #tpu.memory_space<vmem>>) attributes {dimension_semantics = [#tpu.dimension_semantics<parallel>], iteration_bounds = array<i64: 2>, scalar_prefetch = 0 : i64, scratch_operands = 2 : i64, tpu.core_type = #tpu.core_type<tc>, window_params = [{transform_indices = @transform_0, window_bounds = array<i64: 1, 64, 64>}, {pipeline_mode = #tpu.pipeline_mode<synchronous>, transform_indices = @transform_1, window_bounds = array<i64: 64, 128>}, {pipeline_mode = #tpu.pipeline_mode<synchronous>, transform_indices = @transform_2, window_bounds = array<i64: 1, 128>}, {pipeline_mode = #tpu.pipeline_mode<synchronous>, transform_indices = @transform_3, window_bounds = array<i64: 3, 384, 128>}, {pipeline_mode = #tpu.pipeline_mode<synchronous>, transform_indices = @transform_4, window_bounds = array<i64: 1, 128>}, {transform_indices = @transform_5, window_bounds = array<i64: 1, 8, 8, 128>}, {transform_indices = @transform_6, window_bounds = array<i64: 1, 64, 128>}]} {
    %cst = arith.constant 0.000000e+00 : f32
    %0 = vector.broadcast %cst : f32 to vector<1x24x128xf32>
    %c0 = arith.constant 0 : index
    %c0_0 = arith.constant 0 : index
    %c0_1 = arith.constant 0 : index
    %1 = vector.load %arg8[%c0, %c0_0, %c0_1] : memref<10x24x128xf32, #tpu.memory_space<vmem>>, vector<1x24x128xf32>
    tpu.vector_store %arg8[%c0, %c0_0, %c0_1], %0 {strides = array<i32>} : memref<10x24x128xf32, #tpu.memory_space<vmem>>, vector<1x24x128xf32>,
    %c9 = arith.constant 9 : index
    %c0_2 = arith.constant 0 : index
    %c0_3 = arith.constant 0 : index
    %2 = vector.load %arg8[%c9, %c0_2, %c0_3] : memref<10x24x128xf32, #tpu.memory_space<vmem>>, vector<1x24x128xf32>
    tpu.vector_store %arg8[%c9, %c0_2, %c0_3], %0 {strides = array<i32>} : memref<10x24x128xf32, #tpu.memory_space<vmem>>, vector<1x24x128xf32>,
    %cst_4 = arith.constant 0.000000e+00 : f32
    %3 = vector.broadcast %cst_4 : f32 to vector<10x8x128xf32>
    %c0_5 = arith.constant 0 : index
    %c0_6 = arith.constant 0 : index
    %c0_7 = arith.constant 0 : index
    %4 = vector.load %arg8[%c0_5, %c0_6, %c0_7] : memref<10x24x128xf32, #tpu.memory_space<vmem>>, vector<10x8x128xf32>
    tpu.vector_store %arg8[%c0_5, %c0_6, %c0_7], %3 {strides = array<i32>} : memref<10x24x128xf32, #tpu.memory_space<vmem>>, vector<10x8x128xf32>,
    %c0_8 = arith.constant 0 : index
    %c16 = arith.constant 16 : index
    %c0_9 = arith.constant 0 : index
    %5 = vector.load %arg8[%c0_8, %c16, %c0_9] : memref<10x24x128xf32, #tpu.memory_space<vmem>>, vector<10x8x128xf32>
    tpu.vector_store %arg8[%c0_8, %c16, %c0_9], %3 {strides = array<i32>} : memref<10x24x128xf32, #tpu.memory_space<vmem>>, vector<10x8x128xf32>,
    %c0_10 = arith.constant 0 : index
    %c0_11 = arith.constant 0 : index
    %c0_12 = arith.constant 0 : index
    %6 = vector.load %arg1[%c0_10, %c0_11, %c0_12] : memref<1x64x64xf32, #tpu.memory_space<vmem>>, vector<1x64x64xf32>
    %7 = vector.shape_cast %6 : vector<1x64x64xf32> to vector<64x64xf32>
    %8 = arith.truncf %7 : vector<64x64xf32> to vector<64x64xbf16>
    %c0_13 = arith.constant 0 : index
    %c0_14 = arith.constant 0 : index
    %9 = vector.load %arg2[%c0_13, %c0_14] : memref<64x128xbf16, #tpu.memory_space<vmem>>, vector<64x128xbf16>
    %cst_15 = arith.constant dense<0.000000e+00> : vector<64x128xf32>
    %10 = tpu.matmul %8, %9, %cst_15 {dimension_numbers = #tpu.dot_dimension_numbers<[1], [0], [0], [1], [0, 0, 1, 1], [], []>} : vector<64x64xbf16>, vector<64x128xbf16>, vector<64x128xf32> -> vector<64x128xf32>
    %c0_16 = arith.constant 0 : index
    %c0_17 = arith.constant 0 : index
    %11 = vector.load %arg3[%c0_16, %c0_17] : memref<1x128xf32, #tpu.memory_space<vmem>>, vector<1x128xf32>
    %12 = vector.broadcast %11 : vector<1x128xf32> to vector<64x128xf32>
    %13 = arith.addf %10, %12 : vector<64x128xf32>
    %14 = vector.shape_cast %13 : vector<64x128xf32> to vector<8x8x128xf32>
    %c0_18 = arith.constant 0 : index
    %c0_19 = arith.constant 0 : index
    %c0_20 = arith.constant 0 : index
    %c0_21 = arith.constant 0 : index
    %15 = vector.load %arg6[%c0_18, %c0_19, %c0_20, %c0_21] : memref<1x8x8x128xf32, #tpu.memory_space<vmem>>, vector<1x8x8x128xf32>
    %16 = vector.shape_cast %15 : vector<1x8x8x128xf32> to vector<8x8x128xf32>
    %17 = vector.shape_cast %14 : vector<8x8x128xf32> to vector<1x8x8x128xf32>
    tpu.vector_store %arg6[%c0_18, %c0_19, %c0_20, %c0_21], %17 {strides = array<i32>} : memref<1x8x8x128xf32, #tpu.memory_space<vmem>>, vector<1x8x8x128xf32>,
    %c1 = arith.constant 1 : index
    %c8 = arith.constant 8 : index
    %c0_22 = arith.constant 0 : index
    %18 = vector.load %arg8[%c1, %c8, %c0_22] : memref<10x24x128xf32, #tpu.memory_space<vmem>>, vector<8x8x128xf32>
    tpu.vector_store %arg8[%c1, %c8, %c0_22], %14 {strides = array<i32>} : memref<10x24x128xf32, #tpu.memory_space<vmem>>, vector<8x8x128xf32>,
    %c0_23 = arith.constant 0 : index
    %c7 = arith.constant 7 : index
    %c0_24 = arith.constant 0 : index
    %19 = vector.load %arg8[%c0_23, %c7, %c0_24] : memref<10x24x128xf32, #tpu.memory_space<vmem>>, vector<10x8x128xf32>
    %c0_25 = arith.constant 0 : index
    %c0_26 = arith.constant 0 : index
    %c0_27 = arith.constant 0 : index
    %20 = vector.load %arg9[%c0_25, %c0_26, %c0_27] : memref<10x8x384xf32, #tpu.memory_space<vmem>>, vector<10x8x128xf32>
    tpu.vector_store %arg9[%c0_25, %c0_26, %c0_27], %19 {strides = array<i32>} : memref<10x8x384xf32, #tpu.memory_space<vmem>>, vector<10x8x128xf32>,
    %c0_28 = arith.constant 0 : index
    %c8_29 = arith.constant 8 : index
    %c0_30 = arith.constant 0 : index
    %21 = vector.load %arg8[%c0_28, %c8_29, %c0_30] : memref<10x24x128xf32, #tpu.memory_space<vmem>>, vector<10x8x128xf32>
    %c0_31 = arith.constant 0 : index
    %c0_32 = arith.constant 0 : index
    %c128 = arith.constant 128 : index
    %22 = vector.load %arg9[%c0_31, %c0_32, %c128] : memref<10x8x384xf32, #tpu.memory_space<vmem>>, vector<10x8x128xf32>
    tpu.vector_store %arg9[%c0_31, %c0_32, %c128], %21 {strides = array<i32>} : memref<10x8x384xf32, #tpu.memory_space<vmem>>, vector<10x8x128xf32>,
    %c0_33 = arith.constant 0 : index
    %c9_34 = arith.constant 9 : index
    %c0_35 = arith.constant 0 : index
    %23 = vector.load %arg8[%c0_33, %c9_34, %c0_35] : memref<10x24x128xf32, #tpu.memory_space<vmem>>, vector<10x8x128xf32>
    %c0_36 = arith.constant 0 : index
    %c0_37 = arith.constant 0 : index
    %c256 = arith.constant 256 : index
    %24 = vector.load %arg9[%c0_36, %c0_37, %c256] : memref<10x8x384xf32, #tpu.memory_space<vmem>>, vector<10x8x128xf32>
    tpu.vector_store %arg9[%c0_36, %c0_37, %c256], %23 {strides = array<i32>} : memref<10x8x384xf32, #tpu.memory_space<vmem>>, vector<10x8x128xf32>,
    %c0_38 = arith.constant 0 : index
    %c0_39 = arith.constant 0 : index
    %25 = vector.load %arg5[%c0_38, %c0_39] : memref<1x128xf32, #tpu.memory_space<vmem>>, vector<1x128xf32>
    %c0_40 = arith.constant 0 : index
    %c0_41 = arith.constant 0 : index
    %c0_42 = arith.constant 0 : index
    %26 = vector.load %arg9[%c0_40, %c0_41, %c0_42] : memref<10x8x384xf32, #tpu.memory_space<vmem>>, vector<8x8x384xf32>
    %27 = vector.shape_cast %26 : vector<8x8x384xf32> to vector<64x384xf32>
    %28 = arith.truncf %27 : vector<64x384xf32> to vector<64x384xbf16>
    %c0_43 = arith.constant 0 : index
    %c0_44 = arith.constant 0 : index
    %c0_45 = arith.constant 0 : index
    %29 = vector.load %arg4[%c0_43, %c0_44, %c0_45] : memref<3x384x128xbf16, #tpu.memory_space<vmem>>, vector<1x384x128xbf16>
    %30 = vector.shape_cast %29 : vector<1x384x128xbf16> to vector<384x128xbf16>
    %cst_46 = arith.constant dense<0.000000e+00> : vector<64x128xf32>
    %31 = tpu.matmul %28, %30, %cst_46 {dimension_numbers = #tpu.dot_dimension_numbers<[1], [0], [0], [1], [0, 0, 1, 1], [], []>} : vector<64x384xbf16>, vector<384x128xbf16>, vector<64x128xf32> -> vector<64x128xf32>
    %32 = vector.broadcast %25 : vector<1x128xf32> to vector<64x128xf32>
    %33 = arith.addf %31, %32 : vector<64x128xf32>
    %c1_47 = arith.constant 1 : index
    %c0_48 = arith.constant 0 : index
    %c0_49 = arith.constant 0 : index
    %34 = vector.load %arg9[%c1_47, %c0_48, %c0_49] : memref<10x8x384xf32, #tpu.memory_space<vmem>>, vector<8x8x384xf32>
    %35 = vector.shape_cast %34 : vector<8x8x384xf32> to vector<64x384xf32>
    %36 = arith.truncf %35 : vector<64x384xf32> to vector<64x384xbf16>
    %c1_50 = arith.constant 1 : index
    %c0_51 = arith.constant 0 : index
    %c0_52 = arith.constant 0 : index
    %37 = vector.load %arg4[%c1_50, %c0_51, %c0_52] : memref<3x384x128xbf16, #tpu.memory_space<vmem>>, vector<1x384x128xbf16>
    %38 = vector.shape_cast %37 : vector<1x384x128xbf16> to vector<384x128xbf16>
    %cst_53 = arith.constant dense<0.000000e+00> : vector<64x128xf32>
    %39 = tpu.matmul %36, %38, %cst_53 {dimension_numbers = #tpu.dot_dimension_numbers<[1], [0], [0], [1], [0, 0, 1, 1], [], []>} : vector<64x384xbf16>, vector<384x128xbf16>, vector<64x128xf32> -> vector<64x128xf32>
    %40 = arith.addf %33, %39 : vector<64x128xf32>
    %c2 = arith.constant 2 : index
    %c0_54 = arith.constant 0 : index
    %c0_55 = arith.constant 0 : index
    %41 = vector.load %arg9[%c2, %c0_54, %c0_55] : memref<10x8x384xf32, #tpu.memory_space<vmem>>, vector<8x8x384xf32>
    %42 = vector.shape_cast %41 : vector<8x8x384xf32> to vector<64x384xf32>
    %43 = arith.truncf %42 : vector<64x384xf32> to vector<64x384xbf16>
    %c2_56 = arith.constant 2 : index
    %c0_57 = arith.constant 0 : index
    %c0_58 = arith.constant 0 : index
    %44 = vector.load %arg4[%c2_56, %c0_57, %c0_58] : memref<3x384x128xbf16, #tpu.memory_space<vmem>>, vector<1x384x128xbf16>
    %45 = vector.shape_cast %44 : vector<1x384x128xbf16> to vector<384x128xbf16>
    %cst_59 = arith.constant dense<0.000000e+00> : vector<64x128xf32>
    %46 = tpu.matmul %43, %45, %cst_59 {dimension_numbers = #tpu.dot_dimension_numbers<[1], [0], [0], [1], [0, 0, 1, 1], [], []>} : vector<64x384xbf16>, vector<384x128xbf16>, vector<64x128xf32> -> vector<64x128xf32>
    %47 = arith.addf %40, %46 : vector<64x128xf32>
    %c0_60 = arith.constant 0 : index
    %c0_61 = arith.constant 0 : index
    %c0_62 = arith.constant 0 : index
    %48 = vector.load %arg7[%c0_60, %c0_61, %c0_62] : memref<1x64x128xf32, #tpu.memory_space<vmem>>, vector<1x64x128xf32>
    %49 = vector.shape_cast %48 : vector<1x64x128xf32> to vector<64x128xf32>
    %50 = vector.shape_cast %47 : vector<64x128xf32> to vector<1x64x128xf32>
    tpu.vector_store %arg7[%c0_60, %c0_61, %c0_62], %50 {strides = array<i32>} : memref<1x64x128xf32, #tpu.memory_space<vmem>>, vector<1x64x128xf32>,
    return
  }
  func.func @transform_0(%arg0: i32) -> (i32, i32, i32) {
    %c0_i32 = arith.constant 0 : i32
    %c0_i32_0 = arith.constant 0 : i32
    %c0_i32_1 = arith.constant 0 : i32
    return %arg0, %c0_i32, %c0_i32_0 : i32, i32, i32
  }
  func.func @transform_1(%arg0: i32) -> (i32, i32) {
    %c0_i32 = arith.constant 0 : i32
    %c0_i32_0 = arith.constant 0 : i32
    %c0_i32_1 = arith.constant 0 : i32
    return %c0_i32, %c0_i32_0 : i32, i32
  }
  func.func @transform_2(%arg0: i32) -> (i32, i32) {
    %c0_i32 = arith.constant 0 : i32
    %c0_i32_0 = arith.constant 0 : i32
    %c0_i32_1 = arith.constant 0 : i32
    return %c0_i32, %c0_i32_0 : i32, i32
  }
  func.func @transform_3(%arg0: i32) -> (i32, i32, i32) {
    %c0_i32 = arith.constant 0 : i32
    %c0_i32_0 = arith.constant 0 : i32
    %c0_i32_1 = arith.constant 0 : i32
    %c0_i32_2 = arith.constant 0 : i32
    return %c0_i32, %c0_i32_0, %c0_i32_1 : i32, i32, i32
  }
  func.func @transform_4(%arg0: i32) -> (i32, i32) {
    %c0_i32 = arith.constant 0 : i32
    %c0_i32_0 = arith.constant 0 : i32
    %c0_i32_1 = arith.constant 0 : i32
    return %c0_i32, %c0_i32_0 : i32, i32
  }
  func.func @transform_5(%arg0: i32) -> (i32, i32, i32, i32) {
    %c0_i32 = arith.constant 0 : i32
    %c0_i32_0 = arith.constant 0 : i32
    %c0_i32_1 = arith.constant 0 : i32
    %c0_i32_2 = arith.constant 0 : i32
    return %arg0, %c0_i32, %c0_i32_0, %c0_i32_1 : i32, i32, i32, i32
  }
  func.func @transform_6(%arg0: i32) -> (i32, i32, i32) {
    %c0_i32 = arith.constant 0 : i32
    %c0_i32_0 = arith.constant 0 : i32
    %c0_i32_1 = arith.constant 0 : i32
    return %arg0, %c0_i32, %c0_i32_0 : i32, i32, i32
  }
}

</mosaic_0001>

<llo_original>
// kernel: tpu_custom_call.1
$region0: #{tpu_custom_call.1}
  #allocation0 [shape = 'u32[]', space=smem, size = 0x4, offset = 0x4, fixed_abs, tag = 'smem constant byte address 0x4 - core index']
  #allocation1 [shape = 'u32[72,128]{1,0:T(1,128)}', space=vmem, size = 0x9000, scoped, tag = 'internal scratch']
  #allocation2 [shape = 'f32[10,24,128]{2,1,0:T(8,128)}', space=vmem, size = 0x1e000, scoped, tag = 'scratch operand']
  #allocation3 [shape = 'f32[10,8,384]{2,1,0:T(8,128)}', space=vmem, size = 0x1e000, scoped, tag = 'scratch operand']
  %s0 = inlined_call_operand.hbm [shape: f32[2,64,64], index: 0, kind: input, shape index: {}]
  %s1 = inlined_call_operand.hbm [shape: bf16[64,128], index: 1, kind: input, shape index: {}]
  %s2 = inlined_call_operand.vmem [shape: f32[1,128], index: 2, kind: input, shape index: {}]
  %s3 = inlined_call_operand.hbm [shape: bf16[3,384,128], index: 3, kind: input, shape index: {}]
  %s4 = inlined_call_operand.vmem [shape: f32[1,128], index: 4, kind: input, shape index: {}]
  %s5 = inlined_call_operand.hbm [shape: f32[2,8,8,128], index: 5, kind: output, shape index: {0}]
  %s6 = inlined_call_operand.hbm [shape: f32[2,64,128], index: 6, kind: output, shape index: {1}]
  %7 = xla_tuple %s5, %s6
  %s8 = sld [smem:[#allocation0]]
  $region73: #{tpu_custom_call.1} parent=0
    _
  %s10 = ssub.s32 1, %s8
  %s11 = scalar_select 0, %s10, %s8
  $region1: #{tpu_custom_call.1} parent=0
    #allocation4 [shape = 'u8[65536]{0}', space=vmem, size = 0x10000, scoped, tag = 'input window, operand 0']
    #allocation5 [shape = 's32[2]{0}', space=sflag, size = 0x8, scoped, tag = 'scoped memory for tpu_custom_call.1']
    #allocation6 [shape = 's32[2]{0}', space=sflag, size = 0x8, scoped, tag = 'scoped memory for tpu_custom_call.1']
    #allocation7 [shape = 'u8[16384]{0}', space=vmem, size = 0x4000, scoped, tag = 'input window, operand 1, single buffered']
    #allocation8 [shape = 's32[1]{0}', space=sflag, size = 0x4, scoped, tag = 'scoped memory for tpu_custom_call.1']
    #allocation9 [shape = 'u8[294912]{0}', space=vmem, size = 0x48000, scoped, tag = 'input window, operand 3, single buffered']
    #allocation10 [shape = 'u8[65536]{0}', space=vmem, size = 0x10000, scoped, tag = 'output window, operand 0']
    #allocation11 [shape = 'u8[65536]{0}', space=vmem, size = 0x10000, scoped, tag = 'output window, operand 1']
    #allocation12 [shape = 's32[2]{0}', space=sflag, size = 0x8, scoped, tag = 'scoped memory for tpu_custom_call.1']
    %12 = vsyncpa [#allocation5], 0
    %s13 = scalar_lea.sflag [#allocation5], 1
    %14 = vsyncpa %s13, 0
    %15 = vsyncpa [#allocation8], 0
    %16 = vsyncpa [#allocation6], 0
    %s17 = scalar_lea.sflag [#allocation6], 1
    %18 = vsyncpa %s17, 0
    %19 = vsyncpa [#allocation12], 0
    %s20 = scalar_lea.sflag [#allocation12], 1
    %21 = vsyncpa %s20, 0
    loop: start=0, step=1, limit=4
    $region2: #{tpu_custom_call.1} parent=1 // loop_pre_header
      _
    $region3: #{tpu_custom_call.1} parent=1 // loop_header
      %s23 = sphi 0, %s27
      %p24 = scmp.ge.s32.totalorder %s23, 4
      %s33 = sphi 0, %s35
      %s36 = sphi 0, %s33
      %s37 = sphi 0, %s36
      %s53 = sphi 0, %s37
      %s57 = sphi 0, %s57
      %s59 = sphi 0, %s57
      %s60 = sphi 0, %s59
      %s74 = sphi 0, %s60
      %s78 = sphi 0, %s78
      %s80 = sphi 0, %s78
      %s81 = sphi 0, %s80
      %s95 = sphi 0, %s81
      %s99 = sphi 0, %s99
      %s101 = sphi 0, %s99
      %s102 = sphi 0, %s101
      %s116 = sphi 0, %s102
      %s120 = sphi 0, %s120
      %s122 = sphi 0, %s120
      %s123 = sphi 0, %s122
      %s137 = sphi 0, %s123
      %s143 = sphi 0, %s145
      %s146 = sphi 0, %s143
      %s147 = sphi 0, %s146
      %s163 = sphi 0, %s147
      %s169 = sphi 0, %s171
      %s172 = sphi 0, %s169
      %s173 = sphi 0, %s172
      %s189 = sphi 0, %s173
    $region4: #{tpu_custom_call.1} parent=1 // loop_header_branch
      %26 = sbr.rel (%p24) target = $region8
    $region5: #{tpu_custom_call.1} parent=1 // loop_body
      %s28 = ssub.s32 %s23, 1
      %s29 = ssub.s32 %s23, 2
      %s30 = sadd.s32 %s23, 1
      %s31 = ssub.s32 %s23, %s30
      %p32 = scmp.eq.s32.totalorder %s31, 0
      %s34 = sadd.s32 %s33, 1
      %s35 = scalar_select %p32, %s33, %s34
      %p38 = pneg %p32
      %p39 = scmp.eq.s32.totalorder %s23, 1
      %p40 = por %p38, %p39
      %p41 = scmp.ne.s32.totalorder %s33, %s36
      %p42 = scmp.eq.s32.totalorder %s23, 0
      %p43 = por %p41, %p42
      %p44 = scmp.ne.s32.totalorder %s33, %s36
      %p45 = scmp.eq.s32.totalorder %s28, 1
      %p46 = por %p44, %p45
      %p47 = scmp.ne.s32.totalorder %s36, %s37
      %p48 = scmp.eq.s32.totalorder %s28, 0
      %p49 = por %p47, %p48
      %p50 = scmp.ne.s32.totalorder %s36, %s37
      %p51 = scmp.eq.s32.totalorder %s29, 1
      %p52 = por %p50, %p51
      %p54 = scmp.ne.s32.totalorder %s37, %s53
      %p55 = scmp.eq.s32.totalorder %s29, 0
      %p56 = por %p54, %p55
      %s58 = sadd.s32 %s57, 1
      %p61 = scmp.eq.s32.totalorder %s23, 1
      %p62 = scmp.ne.s32.totalorder %s57, %s59
      %p63 = scmp.eq.s32.totalorder %s23, 0
      %p64 = por %p62, %p63
      %p65 = scmp.ne.s32.totalorder %s57, %s59
      %p66 = scmp.eq.s32.totalorder %s28, 1
      %p67 = por %p65, %p66
      %p68 = scmp.ne.s32.totalorder %s59, %s60
      %p69 = scmp.eq.s32.totalorder %s28, 0
      %p70 = por %p68, %p69
      %p71 = scmp.ne.s32.totalorder %s59, %s60
      %p72 = scmp.eq.s32.totalorder %s29, 1
      %p73 = por %p71, %p72
      %p75 = scmp.ne.s32.totalorder %s60, %s74
      %p76 = scmp.eq.s32.totalorder %s29, 0
      %p77 = por %p75, %p76
      %s79 = sadd.s32 %s78, 1
      %p82 = scmp.eq.s32.totalorder %s23, 1
      %p83 = scmp.ne.s32.totalorder %s78, %s80
      %p84 = scmp.eq.s32.totalorder %s23, 0
      %p85 = por %p83, %p84
      %p86 = scmp.ne.s32.totalorder %s78, %s80
      %p87 = scmp.eq.s32.totalorder %s28, 1
      %p88 = por %p86, %p87
      %p89 = scmp.ne.s32.totalorder %s80, %s81
      %p90 = scmp.eq.s32.totalorder %s28, 0
      %p91 = por %p89, %p90
      %p92 = scmp.ne.s32.totalorder %s80, %s81
      %p93 = scmp.eq.s32.totalorder %s29, 1
      %p94 = por %p92, %p93
      %p96 = scmp.ne.s32.totalorder %s81, %s95
      %p97 = scmp.eq.s32.totalorder %s29, 0
      %p98 = por %p96, %p97
      %s100 = sadd.s32 %s99, 1
      %p103 = scmp.eq.s32.totalorder %s23, 1
      %p104 = scmp.ne.s32.totalorder %s99, %s101
      %p105 = scmp.eq.s32.totalorder %s23, 0
      %p106 = por %p104, %p105
      %p107 = scmp.ne.s32.totalorder %s99, %s101
      %p108 = scmp.eq.s32.totalorder %s28, 1
      %p109 = por %p107, %p108
      %p110 = scmp.ne.s32.totalorder %s101, %s102
      %p111 = scmp.eq.s32.totalorder %s28, 0
      %p112 = por %p110, %p111
      %p113 = scmp.ne.s32.totalorder %s101, %s102
      %p114 = scmp.eq.s32.totalorder %s29, 1
      %p115 = por %p113, %p114
      %p117 = scmp.ne.s32.totalorder %s102, %s116
      %p118 = scmp.eq.s32.totalorder %s29, 0
      %p119 = por %p117, %p118
      %s121 = sadd.s32 %s120, 1
      %p124 = scmp.eq.s32.totalorder %s23, 1
      %p125 = scmp.ne.s32.totalorder %s120, %s122
      %p126 = scmp.eq.s32.totalorder %s23, 0
      %p127 = por %p125, %p126
      %p128 = scmp.ne.s32.totalorder %s120, %s122
      %p129 = scmp.eq.s32.totalorder %s28, 1
      %p130 = por %p128, %p129
      %p131 = scmp.ne.s32.totalorder %s122, %s123
      %p132 = scmp.eq.s32.totalorder %s28, 0
      %p133 = por %p131, %p132
      %p134 = scmp.ne.s32.totalorder %s122, %s123
      %p135 = scmp.eq.s32.totalorder %s29, 1
      %p136 = por %p134, %p135
      %p138 = scmp.ne.s32.totalorder %s123, %s137
      %p139 = scmp.eq.s32.totalorder %s29, 0
      %p140 = por %p138, %p139
      %s141 = ssub.s32 %s23, %s30
      %p142 = scmp.eq.s32.totalorder %s141, 0
      %s144 = sadd.s32 %s143, 1
      %s145 = scalar_select %p142, %s143, %s144
      %p148 = pneg %p142
      %p149 = scmp.eq.s32.totalorder %s23, 1
      %p150 = por %p148, %p149
      %p151 = scmp.ne.s32.totalorder %s143, %s146
      %p152 = scmp.eq.s32.totalorder %s23, 0
      %p153 = por %p151, %p152
      %p154 = scmp.ne.s32.totalorder %s143, %s146
      %p155 = scmp.eq.s32.totalorder %s28, 1
      %p156 = por %p154, %p155
      %p157 = scmp.ne.s32.totalorder %s146, %s147
      %p158 = scmp.eq.s32.totalorder %s28, 0
      %p159 = por %p157, %p158
      %p160 = scmp.ne.s32.totalorder %s146, %s147
      %p161 = scmp.eq.s32.totalorder %s29, 1
      %p162 = por %p160, %p161
      %p164 = scmp.ne.s32.totalorder %s147, %s163
      %p165 = scmp.eq.s32.totalorder %s29, 0
      %p166 = por %p164, %p165
      %s167 = ssub.s32 %s23, %s30
      %p168 = scmp.eq.s32.totalorder %s167, 0
      %s170 = sadd.s32 %s169, 1
      %s171 = scalar_select %p168, %s169, %s170
      %p174 = pneg %p168
      %p175 = scmp.eq.s32.totalorder %s23, 1
      %p176 = por %p174, %p175
      %p177 = scmp.ne.s32.totalorder %s169, %s172
      %p178 = scmp.eq.s32.totalorder %s23, 0
      %p179 = por %p177, %p178
      %p180 = scmp.ne.s32.totalorder %s169, %s172
      %p181 = scmp.eq.s32.totalorder %s28, 1
      %p182 = por %p180, %p181
      %p183 = scmp.ne.s32.totalorder %s172, %s173
      %p184 = scmp.eq.s32.totalorder %s28, 0
      %p185 = por %p183, %p184
      %p186 = scmp.ne.s32.totalorder %s172, %s173
      %p187 = scmp.eq.s32.totalorder %s29, 1
      %p188 = por %p186, %p187
      %p190 = scmp.ne.s32.totalorder %s173, %s189
      %p191 = scmp.eq.s32.totalorder %s29, 0
      %p192 = por %p190, %p191
      %p193 = scmp.le.s32.totalorder 1, %s23
      %p194 = scmp.lt.s32.totalorder %s23, 3
      %p195 = pnand %p193, %p194
      %p196 = pneg %p195
      // Predicated region
      $region9: #{tpu_custom_call.1} parent=5 // pred_check
        _
      $region10: #{tpu_custom_call.1} parent=5 // pred_check_branch
        %198 = sbr.rel (%p195) target = $region12
      $region11: #{tpu_custom_call.1} parent=5 // pred_region
        %s199 = ssub.s32 %s23, 1
        // Predicated region
        $region13: #{tpu_custom_call.1} parent=11 // pred_check
          %p200 = pneg %p70
        $region14: #{tpu_custom_call.1} parent=11 // pred_check_branch
          %202 = sbr.rel (%p200) target = $region16
        $region15: #{tpu_custom_call.1} parent=11 // pred_region
          %204 = vsyncadd [#allocation8], 0
          %s205 = sshll.u32 %s1, 4
          %s206 = int_to_ptr.hbm [resolvable:$true] %s205
          %s207 = sshll.u32 [#allocation7], 4
          %s208 = int_to_ptr.vmem [resolvable:$true] %s207
          %213 = dma.hbm_to_vmem [thread:$0]  %s206, 512, %s208, [#allocation8], 64, 64, 4
        $region16: #{tpu_custom_call.1} parent=11 // pred_fallthru
          _
        // Predicated region
        $region17: #{tpu_custom_call.1} parent=11 // pred_check
          %p214 = pneg %p91
        $region18: #{tpu_custom_call.1} parent=11 // pred_check_branch
          %216 = sbr.rel (%p214) target = $region20
        $region19: #{tpu_custom_call.1} parent=11 // pred_region
          _
        $region20: #{tpu_custom_call.1} parent=11 // pred_fallthru
          _
        // Predicated region
        $region21: #{tpu_custom_call.1} parent=11 // pred_check
          %p217 = pneg %p112
        $region22: #{tpu_custom_call.1} parent=11 // pred_check_branch
          %219 = sbr.rel (%p217) target = $region24
        $region23: #{tpu_custom_call.1} parent=11 // pred_region
          %221 = vsyncadd [#allocation8], 0
          %s222 = sshll.u32 %s3, 4
          %s223 = int_to_ptr.hbm [resolvable:$true] %s222
          %s224 = sshll.u32 [#allocation9], 4
          %s225 = int_to_ptr.vmem [resolvable:$true] %s224
          %230 = dma.hbm_to_vmem [thread:$0]  %s223, 9216, %s225, [#allocation8], 64, 64, 4
        $region24: #{tpu_custom_call.1} parent=11 // pred_fallthru
          _
        // Predicated region
        $region25: #{tpu_custom_call.1} parent=11 // pred_check
          %p231 = pneg %p133
        $region26: #{tpu_custom_call.1} parent=11 // pred_check_branch
          %233 = sbr.rel (%p231) target = $region28
        $region27: #{tpu_custom_call.1} parent=11 // pred_region
          _
        $region28: #{tpu_custom_call.1} parent=11 // pred_fallthru
          _
      $region12: #{tpu_custom_call.1} parent=5 // pred_fallthru
        _
      %p234 = scmp.lt.s32.totalorder %s23, 2
      // Predicated region
      $region29: #{tpu_custom_call.1} parent=5 // pred_check
        %p235 = pneg %p234
      $region30: #{tpu_custom_call.1} parent=5 // pred_check_branch
        %237 = sbr.rel (%p235) target = $region32
      $region31: #{tpu_custom_call.1} parent=5 // pred_region
        // Predicated region
        $region33: #{tpu_custom_call.1} parent=31 // pred_check
          %p238 = pneg %p43
        $region34: #{tpu_custom_call.1} parent=31 // pred_check_branch
          %240 = sbr.rel (%p238) target = $region36
        $region35: #{tpu_custom_call.1} parent=31 // pred_region
          %s241 = sand.u32 %s33, 1
          %s242 = scalar_lea.sflag [#allocation5], %s241
          %s243 = sand.u32 %s33, 1
          %s244 = smul.addr %s243, 64
          %s245 = scalar_lea.vmem [#allocation4], %s244
          %247 = vsyncadd %s242, 0
          %s248 = smul.addr %s23, 8
          %s249 = smul.addr %s248, 8
          %s250 = scalar_lea.hbm %s0, %s249
          %s251 = sshll.u32 %s250, 4
          %s252 = int_to_ptr.hbm [resolvable:$true] %s251
          %s253 = sshll.u32 %s245, 4
          %s254 = int_to_ptr.vmem [resolvable:$true] %s253
          %259 = dma.hbm_to_vmem [thread:$0]  %s252, 1024, %s254, %s242, 128, 128, 8
        $region36: #{tpu_custom_call.1} parent=31 // pred_fallthru
          _
      $region32: #{tpu_custom_call.1} parent=5 // pred_fallthru
        _
      %p260 = scmp.le.s32.totalorder 1, %s23
      %p261 = scmp.lt.s32.totalorder %s23, 3
      %p262 = pnand %p260, %p261
      %p263 = pneg %p262
      // Predicated region
      $region37: #{tpu_custom_call.1} parent=5 // pred_check
        _
      $region38: #{tpu_custom_call.1} parent=5 // pred_check_branch
        %265 = sbr.rel (%p262) target = $region40
      $region39: #{tpu_custom_call.1} parent=5 // pred_region
        %s266 = ssub.s32 %s23, 1
        %s267 = sand.u32 %s36, 1
        %s268 = scalar_lea.sflag [#allocation5], %s267
        %s269 = sand.u32 %s36, 1
        %s270 = smul.addr %s269, 64
        %s271 = scalar_lea.vmem [#allocation4], %s270
        // Predicated region
        $region41: #{tpu_custom_call.1} parent=39 // pred_check
          %p272 = pneg %p49
        $region42: #{tpu_custom_call.1} parent=39 // pred_check_branch
          %274 = sbr.rel (%p272) target = $region44
        $region43: #{tpu_custom_call.1} parent=39 // pred_region
          %276 = dma.done %s268, 1024
        $region44: #{tpu_custom_call.1} parent=39 // pred_fallthru
          _
        // Predicated region
        $region45: #{tpu_custom_call.1} parent=39 // pred_check
          %p277 = pneg %p70
        $region46: #{tpu_custom_call.1} parent=39 // pred_check_branch
          %279 = sbr.rel (%p277) target = $region48
        $region47: #{tpu_custom_call.1} parent=39 // pred_region
          %281 = dma.done [#allocation8], 512
        $region48: #{tpu_custom_call.1} parent=39 // pred_fallthru
          _
        // Predicated region
        $region49: #{tpu_custom_call.1} parent=39 // pred_check
          %p282 = pneg %p112
        $region50: #{tpu_custom_call.1} parent=39 // pred_check_branch
          %284 = sbr.rel (%p282) target = $region52
        $region51: #{tpu_custom_call.1} parent=39 // pred_region
          %286 = dma.done [#allocation8], 9216
        $region52: #{tpu_custom_call.1} parent=39 // pred_fallthru
          _
        %s287 = sand.u32 %s36, 1
        %s288 = scalar_lea.sflag [#allocation5], %s287
        %s289 = sand.u32 %s36, 1
        %s290 = smul.addr %s289, 64
        %s291 = scalar_lea.vmem [#allocation4], %s290
        %p292 = pneg %p49
        %p293 = pneg %p46
        %p294 = pneg %p70
        %p295 = pneg %p67
        %p296 = pneg %p91
        %p297 = pneg %p88
        %p298 = pneg %p112
        %p299 = pneg %p109
        %p300 = pneg %p133
        %p301 = pneg %p130
        %p302 = pneg %p159
        %p303 = pneg %p156
        %s304 = sand.u32 %s146, 1
        %s305 = scalar_lea.sflag [#allocation6], %s304
        %s306 = sand.u32 %s146, 1
        %s307 = smul.addr %s306, 64
        %s308 = scalar_lea.vmem [#allocation10], %s307
        %p309 = pneg %p185
        %p310 = pneg %p182
        %s311 = sand.u32 %s172, 1
        %s312 = scalar_lea.sflag [#allocation12], %s311
        %s313 = sand.u32 %s172, 1
        %s314 = smul.addr %s313, 64
        %s315 = scalar_lea.vmem [#allocation11], %s314
        %317 = vst [vmem:[#allocation2] sm:$0xff] 0.0
        %318 = vst [vmem:[#allocation2 + $0x8] sm:$0xff] 0.0
        %319 = vst [vmem:[#allocation2 + $0x10] sm:$0xff] 0.0
        %s320 = scalar_lea.vmem [#allocation2], 216
        %321 = vst [vmem:[%s320] sm:$0xff] 0.0
        %322 = vst [vmem:[%s320 + $0x8] sm:$0xff] 0.0
        %323 = vst [vmem:[%s320 + $0x10] sm:$0xff] 0.0
        %324 = vst [vmem:[#allocation2] sm:$0xff] 0.0
        %325 = vst [vmem:[#allocation2 + $0x18] sm:$0xff] 0.0
        %326 = vst [vmem:[#allocation2 + $0x30] sm:$0xff] 0.0
        %327 = vst [vmem:[#allocation2 + $0x48] sm:$0xff] 0.0
        %328 = vst [vmem:[#allocation2 + $0x60] sm:$0xff] 0.0
        %329 = vst [vmem:[#allocation2 + $0x78] sm:$0xff] 0.0
        %330 = vst [vmem:[#allocation2 + $0x90] sm:$0xff] 0.0
        %331 = vst [vmem:[#allocation2 + $0xa8] sm:$0xff] 0.0
        %332 = vst [vmem:[#allocation2 + $0xc0] sm:$0xff] 0.0
        %333 = vst [vmem:[#allocation2 + $0xd8] sm:$0xff] 0.0
        %334 = vst [vmem:[#allocation2 + $0x10] sm:$0xff] 0.0
        %335 = vst [vmem:[#allocation2 + $0x28] sm:$0xff] 0.0
        %336 = vst [vmem:[#allocation2 + $0x40] sm:$0xff] 0.0
        %337 = vst [vmem:[#allocation2 + $0x58] sm:$0xff] 0.0
        %338 = vst [vmem:[#allocation2 + $0x70] sm:$0xff] 0.0
        %339 = vst [vmem:[#allocation2 + $0x88] sm:$0xff] 0.0
        %340 = vst [vmem:[#allocation2 + $0xa0] sm:$0xff] 0.0
        %341 = vst [vmem:[#allocation2 + $0xb8] sm:$0xff] 0.0
        %342 = vst [vmem:[#allocation2 + $0xd0] sm:$0xff] 0.0
        %343 = vst [vmem:[#allocation2 + $0xe8] sm:$0xff] 0.0
        %v344 = vld [vmem:[%s271] sm:$0xff]
        %v345 = vld [vmem:[%s271 + $0x8] sm:$0xff]
        %v346 = vld [vmem:[%s271 + $0x10] sm:$0xff]
        %v347 = vld [vmem:[%s271 + $0x18] sm:$0xff]
        %v348 = vld [vmem:[%s271 + $0x20] sm:$0xff]
        %v349 = vld [vmem:[%s271 + $0x28] sm:$0xff]
        %v350 = vld [vmem:[%s271 + $0x30] sm:$0xff]
        %v351 = vld [vmem:[%s271 + $0x38] sm:$0xff]
        %v352 = vpack.c.bf16 %v345, %v344
        %v353 = vpack.c.bf16 %v347, %v346
        %v354 = vpack.c.bf16 %v349, %v348
        %v355 = vpack.c.bf16 %v351, %v350
        %v356 = vld [vmem:[#allocation7] sm:$0xf]
        %v357 = vld [vmem:[#allocation7 + $0x4] sm:$0xf]
        %v358 = vld [vmem:[#allocation7 + $0x8] sm:$0xf]
        %v359 = vld [vmem:[#allocation7 + $0xc] sm:$0xf]
        %v360 = vld [vmem:[#allocation7 + $0x10] sm:$0xf]
        %v361 = vld [vmem:[#allocation7 + $0x14] sm:$0xf]
        %v362 = vld [vmem:[#allocation7 + $0x18] sm:$0xf]
        %v363 = vld [vmem:[#allocation7 + $0x1c] sm:$0xf]
        %v364 = vld [vmem:[%s2] sm:$0x1]
        %v366 = vperm.slane %v364, 0
        %v376 = vunpack.c.l.b16 %v356
        %v377 = vunpack.c.l.b16 %v357
        %v378 = vunpack.c.l.b16 %v358
        %v379 = vunpack.c.l.b16 %v359
        %v380 = vunpack.c.l.b16 %v360
        %v381 = vunpack.c.l.b16 %v361
        %v382 = vunpack.c.l.b16 %v362
        %v383 = vunpack.c.l.b16 %v363
        %v384 = vpack.c.b16 %v377, %v376
        %v385 = vpack.c.b16 %v379, %v378
        %v386 = vpack.c.b16 %v381, %v380
        %v387 = vpack.c.b16 %v383, %v382
        %vm392 = vcmask 523264
        %v394 = vsel %vm392, %v352, 0
        %v397 = vsel %vm392, %v353, 0
        %v400 = vsel %vm392, %v354, 0
        %v403 = vsel %vm392, %v355, 0
        %405 = vmatpush.bf16.msra.mxu0 0
        %406 = vmatpush.bf16.msra.mxu0 0
        %407 = vmatpush.bf16.msra.mxu0 0
        %408 = vmatpush.bf16.msra.mxu0 0
        %409 = vmatpush.bf16.msra.mxu0 %v387
        %410 = vmatpush.bf16.msra.mxu0 %v386
        %411 = vmatpush.bf16.msra.mxu0 %v385
        %412 = vmatpush.bf16.msra.mxu0 %v384
        %413 = vmatmul.bf16.gmra.mxu0 %v394
        %v414 = vpop.f32.mrf.mxu0
        %v415 = vadd.f32 %v366, %v414
        %v416 = vpop.f32.mrf.mxu0
        %v417 = vadd.f32 %v366, %v416
        %418 = vmatmul.bf16.gmra.mxu0 %v397
        %v419 = vpop.f32.mrf.mxu0
        %v420 = vadd.f32 %v366, %v419
        %v421 = vpop.f32.mrf.mxu0
        %v422 = vadd.f32 %v366, %v421
        %423 = vmatmul.bf16.gmra.mxu0 %v400
        %v424 = vpop.f32.mrf.mxu0
        %v425 = vadd.f32 %v366, %v424
        %v426 = vpop.f32.mrf.mxu0
        %v427 = vadd.f32 %v366, %v426
        %428 = vmatmul.bf16.gmra.mxu0 %v403
        %v429 = vpop.f32.mrf.mxu0
        %v430 = vadd.f32 %v366, %v429
        %v431 = vpop.f32.mrf.mxu0
        %v432 = vadd.f32 %v366, %v431
        %433 = vdwg.mxu0
        %434 = vst [vmem:[%s308] sm:$0xff] %v415
        %435 = vst [vmem:[%s308 + $0x8] sm:$0xff] %v417
        %436 = vst [vmem:[%s308 + $0x10] sm:$0xff] %v420
        %437 = vst [vmem:[%s308 + $0x18] sm:$0xff] %v422
        %438 = vst [vmem:[%s308 + $0x20] sm:$0xff] %v425
        %439 = vst [vmem:[%s308 + $0x28] sm:$0xff] %v427
        %440 = vst [vmem:[%s308 + $0x30] sm:$0xff] %v430
        %441 = vst [vmem:[%s308 + $0x38] sm:$0xff] %v432
        %s442 = scalar_lea.vmem [#allocation2], 24
        %443 = vst [vmem:[%s442 + $0x8] sm:$0xff] %v415
        %444 = vst [vmem:[%s442 + $0x20] sm:$0xff] %v417
        %445 = vst [vmem:[%s442 + $0x38] sm:$0xff] %v420
        %446 = vst [vmem:[%s442 + $0x50] sm:$0xff] %v422
        %447 = vst [vmem:[%s442 + $0x68] sm:$0xff] %v425
        %448 = vst [vmem:[%s442 + $0x80] sm:$0xff] %v427
        %449 = vst [vmem:[%s442 + $0x98] sm:$0xff] %v430
        %450 = vst [vmem:[%s442 + $0xb0] sm:$0xff] %v432
        %v451 = vld [vmem:[#allocation2 + $0x7] sm:$0xff]
        %v452 = vld [vmem:[#allocation2 + $0x1f] sm:$0xff]
        %v453 = vld [vmem:[#allocation2 + $0x37] sm:$0xff]
        %v454 = vld [vmem:[#allocation2 + $0x4f] sm:$0xff]
        %v455 = vld [vmem:[#allocation2 + $0x67] sm:$0xff]
        %v456 = vld [vmem:[#allocation2 + $0x7f] sm:$0xff]
        %v457 = vld [vmem:[#allocation2 + $0x97] sm:$0xff]
        %v458 = vld [vmem:[#allocation2 + $0xaf] sm:$0xff]
        %v459 = vld [vmem:[#allocation2 + $0xc7] sm:$0xff]
        %v460 = vld [vmem:[#allocation2 + $0xdf] sm:$0xff]
        %461 = vst [vmem:[#allocation3] sm:$0xff] %v451
        %462 = vst [vmem:[#allocation3 + $0x18] sm:$0xff] %v452
        %463 = vst [vmem:[#allocation3 + $0x30] sm:$0xff] %v453
        %464 = vst [vmem:[#allocation3 + $0x48] sm:$0xff] %v454
        %465 = vst [vmem:[#allocation3 + $0x60] sm:$0xff] %v455
        %466 = vst [vmem:[#allocation3 + $0x78] sm:$0xff] %v456
        %467 = vst [vmem:[#allocation3 + $0x90] sm:$0xff] %v457
        %468 = vst [vmem:[#allocation3 + $0xa8] sm:$0xff] %v458
        %469 = vst [vmem:[#allocation3 + $0xc0] sm:$0xff] %v459
        %470 = vst [vmem:[#allocation3 + $0xd8] sm:$0xff] %v460
        %v471 = vld [vmem:[#allocation2 + $0x8] sm:$0xff]
        %v472 = vld [vmem:[#allocation2 + $0x20] sm:$0xff]
        %v473 = vld [vmem:[#allocation2 + $0x38] sm:$0xff]
        %v474 = vld [vmem:[#allocation2 + $0x50] sm:$0xff]
        %v475 = vld [vmem:[#allocation2 + $0x68] sm:$0xff]
        %v476 = vld [vmem:[#allocation2 + $0x80] sm:$0xff]
        %v477 = vld [vmem:[#allocation2 + $0x98] sm:$0xff]
        %v478 = vld [vmem:[#allocation2 + $0xb0] sm:$0xff]
        %v479 = vld [vmem:[#allocation2 + $0xc8] sm:$0xff]
        %v480 = vld [vmem:[#allocation2 + $0xe0] sm:$0xff]
        %481 = vst [vmem:[#allocation3 + $0x8] sm:$0xff] %v471
        %482 = vst [vmem:[#allocation3 + $0x20] sm:$0xff] %v472
        %483 = vst [vmem:[#allocation3 + $0x38] sm:$0xff] %v473
        %484 = vst [vmem:[#allocation3 + $0x50] sm:$0xff] %v474
        %485 = vst [vmem:[#allocation3 + $0x68] sm:$0xff] %v475
        %486 = vst [vmem:[#allocation3 + $0x80] sm:$0xff] %v476
        %487 = vst [vmem:[#allocation3 + $0x98] sm:$0xff] %v477
        %488 = vst [vmem:[#allocation3 + $0xb0] sm:$0xff] %v478
        %489 = vst [vmem:[#allocation3 + $0xc8] sm:$0xff] %v479
        %490 = vst [vmem:[#allocation3 + $0xe0] sm:$0xff] %v480
        %v491 = vld [vmem:[#allocation2 + $0x9] sm:$0xff]
        %v492 = vld [vmem:[#allocation2 + $0x21] sm:$0xff]
        %v493 = vld [vmem:[#allocation2 + $0x39] sm:$0xff]
        %v494 = vld [vmem:[#allocation2 + $0x51] sm:$0xff]
        %v495 = vld [vmem:[#allocation2 + $0x69] sm:$0xff]
        %v496 = vld [vmem:[#allocation2 + $0x81] sm:$0xff]
        %v497 = vld [vmem:[#allocation2 + $0x99] sm:$0xff]
        %v498 = vld [vmem:[#allocation2 + $0xb1] sm:$0xff]
        %v499 = vld [vmem:[#allocation2 + $0xc9] sm:$0xff]
        %v500 = vld [vmem:[#allocation2 + $0xe1] sm:$0xff]
        %501 = vst [vmem:[#allocation3 + $0x10] sm:$0xff] %v491
        %502 = vst [vmem:[#allocation3 + $0x28] sm:$0xff] %v492
        %503 = vst [vmem:[#allocation3 + $0x40] sm:$0xff] %v493
        %504 = vst [vmem:[#allocation3 + $0x58] sm:$0xff] %v494
        %505 = vst [vmem:[#allocation3 + $0x70] sm:$0xff] %v495
        %506 = vst [vmem:[#allocation3 + $0x88] sm:$0xff] %v496
        %507 = vst [vmem:[#allocation3 + $0xa0] sm:$0xff] %v497
        %508 = vst [vmem:[#allocation3 + $0xb8] sm:$0xff] %v498
        %509 = vst [vmem:[#allocation3 + $0xd0] sm:$0xff] %v499
        %510 = vst [vmem:[#allocation3 + $0xe8] sm:$0xff] %v500
        %v511 = vld [vmem:[%s4] sm:$0x1]
        %v512 = vld [vmem:[#allocation3] sm:$0xff]
        %v513 = vld [vmem:[#allocation3 + $0x8] sm:$0xff]
        %v514 = vld [vmem:[#allocation3 + $0x10] sm:$0xff]
        %v515 = vld [vmem:[#allocation3 + $0x18] sm:$0xff]
        %v516 = vld [vmem:[#allocation3 + $0x20] sm:$0xff]
        %v517 = vld [vmem:[#allocation3 + $0x28] sm:$0xff]
        %v518 = vld [vmem:[#allocation3 + $0x30] sm:$0xff]
        %v519 = vld [vmem:[#allocation3 + $0x38] sm:$0xff]
        %v520 = vld [vmem:[#allocation3 + $0x40] sm:$0xff]
        %v521 = vld [vmem:[#allocation3 + $0x48] sm:$0xff]
        %v522 = vld [vmem:[#allocation3 + $0x50] sm:$0xff]
        %v523 = vld [vmem:[#allocation3 + $0x58] sm:$0xff]
        %v524 = vld [vmem:[#allocation3 + $0x60] sm:$0xff]
        %v525 = vld [vmem:[#allocation3 + $0x68] sm:$0xff]
        %v526 = vld [vmem:[#allocation3 + $0x70] sm:$0xff]
        %v527 = vld [vmem:[#allocation3 + $0x78] sm:$0xff]
        %v528 = vld [vmem:[#allocation3 + $0x80] sm:$0xff]
        %v529 = vld [vmem:[#allocation3 + $0x88] sm:$0xff]
        %v530 = vld [vmem:[#allocation3 + $0x90] sm:$0xff]
        %v531 = vld [vmem:[#allocation3 + $0x98] sm:$0xff]
        %v532 = vld [vmem:[#allocation3 + $0xa0] sm:$0xff]
        %v533 = vld [vmem:[#allocation3 + $0xa8] sm:$0xff]
        %v534 = vld [vmem:[#allocation3 + $0xb0] sm:$0xff]
        %v535 = vld [vmem:[#allocation3 + $0xb8] sm:$0xff]
        %v536 = vpack.c.bf16 %v515, %v512
        %v537 = vpack.c.bf16 %v516, %v513
        %v538 = vpack.c.bf16 %v517, %v514
        %v539 = vpack.c.bf16 %v521, %v518
        %v540 = vpack.c.bf16 %v522, %v519
        %v541 = vpack.c.bf16 %v523, %v520
        %v542 = vpack.c.bf16 %v527, %v524
        %v543 = vpack.c.bf16 %v528, %v525
        %v544 = vpack.c.bf16 %v529, %v526
        %v545 = vpack.c.bf16 %v533, %v530
        %v546 = vpack.c.bf16 %v534, %v531
        %v547 = vpack.c.bf16 %v535, %v532
        %v548 = vld [vmem:[#allocation9] sm:$0xf]
        %v549 = vld [vmem:[#allocation9 + $0x4] sm:$0xf]
        %v550 = vld [vmem:[#allocation9 + $0x8] sm:$0xf]
        %v551 = vld [vmem:[#allocation9 + $0xc] sm:$0xf]
        %v552 = vld [vmem:[#allocation9 + $0x10] sm:$0xf]
        %v553 = vld [vmem:[#allocation9 + $0x14] sm:$0xf]
        %v554 = vld [vmem:[#allocation9 + $0x18] sm:$0xf]
        %v555 = vld [vmem:[#allocation9 + $0x1c] sm:$0xf]
        %v556 = vld [vmem:[#allocation9 + $0x20] sm:$0xf]
        %v557 = vld [vmem:[#allocation9 + $0x24] sm:$0xf]
        %v558 = vld [vmem:[#allocation9 + $0x28] sm:$0xf]
        %v559 = vld [vmem:[#allocation9 + $0x2c] sm:$0xf]
        %v560 = vld [vmem:[#allocation9 + $0x30] sm:$0xf]
        %v561 = vld [vmem:[#allocation9 + $0x34] sm:$0xf]
        %v562 = vld [vmem:[#allocation9 + $0x38] sm:$0xf]
        %v563 = vld [vmem:[#allocation9 + $0x3c] sm:$0xf]
        %v564 = vld [vmem:[#allocation9 + $0x40] sm:$0xf]
        %v565 = vld [vmem:[#allocation9 + $0x44] sm:$0xf]
        %v566 = vld [vmem:[#allocation9 + $0x48] sm:$0xf]
        %v567 = vld [vmem:[#allocation9 + $0x4c] sm:$0xf]
        %v568 = vld [vmem:[#allocation9 + $0x50] sm:$0xf]
        %v569 = vld [vmem:[#allocation9 + $0x54] sm:$0xf]
        %v570 = vld [vmem:[#allocation9 + $0x58] sm:$0xf]
        %v571 = vld [vmem:[#allocation9 + $0x5c] sm:$0xf]
        %v572 = vld [vmem:[#allocation9 + $0x60] sm:$0xf]
        %v573 = vld [vmem:[#allocation9 + $0x64] sm:$0xf]
        %v574 = vld [vmem:[#allocation9 + $0x68] sm:$0xf]
        %v575 = vld [vmem:[#allocation9 + $0x6c] sm:$0xf]
        %v576 = vld [vmem:[#allocation9 + $0x70] sm:$0xf]
        %v577 = vld [vmem:[#allocation9 + $0x74] sm:$0xf]
        %v578 = vld [vmem:[#allocation9 + $0x78] sm:$0xf]
        %v579 = vld [vmem:[#allocation9 + $0x7c] sm:$0xf]
        %v580 = vld [vmem:[#allocation9 + $0x80] sm:$0xf]
        %v581 = vld [vmem:[#allocation9 + $0x84] sm:$0xf]
        %v582 = vld [vmem:[#allocation9 + $0x88] sm:$0xf]
        %v583 = vld [vmem:[#allocation9 + $0x8c] sm:$0xf]
        %v584 = vld [vmem:[#allocation9 + $0x90] sm:$0xf]
        %v585 = vld [vmem:[#allocation9 + $0x94] sm:$0xf]
        %v586 = vld [vmem:[#allocation9 + $0x98] sm:$0xf]
        %v587 = vld [vmem:[#allocation9 + $0x9c] sm:$0xf]
        %v588 = vld [vmem:[#allocation9 + $0xa0] sm:$0xf]
        %v589 = vld [vmem:[#allocation9 + $0xa4] sm:$0xf]
        %v590 = vld [vmem:[#allocation9 + $0xa8] sm:$0xf]
        %v591 = vld [vmem:[#allocation9 + $0xac] sm:$0xf]
        %v592 = vld [vmem:[#allocation9 + $0xb0] sm:$0xf]
        %v593 = vld [vmem:[#allocation9 + $0xb4] sm:$0xf]
        %v594 = vld [vmem:[#allocation9 + $0xb8] sm:$0xf]
        %v595 = vld [vmem:[#allocation9 + $0xbc] sm:$0xf]
        %v597 = vperm.slane %v511, 0
        %v647 = vunpack.c.l.b16 %v548
        %v648 = vunpack.c.l.b16 %v549
        %v649 = vunpack.c.l.b16 %v550
        %v650 = vunpack.c.l.b16 %v551
        %v651 = vunpack.c.l.b16 %v552
        %v652 = vunpack.c.l.b16 %v553
        %v653 = vunpack.c.l.b16 %v554
        %v654 = vunpack.c.l.b16 %v555
        %v655 = vunpack.c.l.b16 %v556
        %v656 = vunpack.c.l.b16 %v557
        %v657 = vunpack.c.l.b16 %v558
        %v658 = vunpack.c.l.b16 %v559
        %v659 = vunpack.c.l.b16 %v560
        %v660 = vunpack.c.l.b16 %v561
        %v661 = vunpack.c.l.b16 %v562
        %v662 = vunpack.c.l.b16 %v563
        %v663 = vunpack.c.l.b16 %v564
        %v664 = vunpack.c.l.b16 %v565
        %v665 = vunpack.c.l.b16 %v566
        %v666 = vunpack.c.l.b16 %v567
        %v667 = vunpack.c.l.b16 %v568
        %v668 = vunpack.c.l.b16 %v569
        %v669 = vunpack.c.l.b16 %v570
        %v670 = vunpack.c.l.b16 %v571
        %v671 = vunpack.c.l.b16 %v572
        %v672 = vunpack.c.l.b16 %v573
        %v673 = vunpack.c.l.b16 %v574
        %v674 = vunpack.c.l.b16 %v575
        %v675 = vunpack.c.l.b16 %v576
        %v676 = vunpack.c.l.b16 %v577
        %v677 = vunpack.c.l.b16 %v578
        %v678 = vunpack.c.l.b16 %v579
        %v679 = vunpack.c.l.b16 %v580
        %v680 = vunpack.c.l.b16 %v581
        %v681 = vunpack.c.l.b16 %v582
        %v682 = vunpack.c.l.b16 %v583
        %v683 = vunpack.c.l.b16 %v584
        %v684 = vunpack.c.l.b16 %v585
        %v685 = vunpack.c.l.b16 %v586
        %v686 = vunpack.c.l.b16 %v587
        %v687 = vunpack.c.l.b16 %v588
        %v688 = vunpack.c.l.b16 %v589
        %v689 = vunpack.c.l.b16 %v590
        %v690 = vunpack.c.l.b16 %v591
        %v691 = vunpack.c.l.b16 %v592
        %v692 = vunpack.c.l.b16 %v593
        %v693 = vunpack.c.l.b16 %v594
        %v694 = vunpack.c.l.b16 %v595
        %v695 = vpack.c.b16 %v648, %v647
        %v696 = vpack.c.b16 %v650, %v649
        %v697 = vpack.c.b16 %v652, %v651
        %v698 = vpack.c.b16 %v654, %v653
        %v699 = vpack.c.b16 %v656, %v655
        %v700 = vpack.c.b16 %v658, %v657
        %v701 = vpack.c.b16 %v660, %v659
        %v702 = vpack.c.b16 %v662, %v661
        %v703 = vpack.c.b16 %v664, %v663
        %v704 = vpack.c.b16 %v666, %v665
        %v705 = vpack.c.b16 %v668, %v667
        %v706 = vpack.c.b16 %v670, %v669
        %v707 = vpack.c.b16 %v672, %v671
        %v708 = vpack.c.b16 %v674, %v673
        %v709 = vpack.c.b16 %v676, %v675
        %v710 = vpack.c.b16 %v678, %v677
        %v711 = vpack.c.b16 %v680, %v679
        %v712 = vpack.c.b16 %v682, %v681
        %v713 = vpack.c.b16 %v684, %v683
        %v714 = vpack.c.b16 %v686, %v685
        %v715 = vpack.c.b16 %v688, %v687
        %v716 = vpack.c.b16 %v690, %v689
        %v717 = vpack.c.b16 %v692, %v691
        %v718 = vpack.c.b16 %v694, %v693
        %743 = vmatpush.bf16.msra.mxu0 %v702
        %744 = vmatpush.bf16.msra.mxu0 %v701
        %745 = vmatpush.bf16.msra.mxu0 %v700
        %746 = vmatpush.bf16.msra.mxu0 %v699
        %747 = vmatpush.bf16.msra.mxu0 %v698
        %748 = vmatpush.bf16.msra.mxu0 %v697
        %749 = vmatpush.bf16.msra.mxu0 %v696
        %750 = vmatpush.bf16.msra.mxu0 %v695
        %751 = vmatmul.bf16.gmra.mxu0 %v536
        %v752 = vpop.f32.mrf.mxu0
        %v753 = vadd.f32 %v597, %v752
        %v754 = vpop.f32.mrf.mxu0
        %v755 = vadd.f32 %v597, %v754
        %756 = vmatmul.bf16.gmra.mxu0 %v539
        %v757 = vpop.f32.mrf.mxu0
        %v758 = vadd.f32 %v597, %v757
        %v759 = vpop.f32.mrf.mxu0
        %v760 = vadd.f32 %v597, %v759
        %761 = vmatmul.bf16.gmra.mxu0 %v542
        %v762 = vpop.f32.mrf.mxu0
        %v763 = vadd.f32 %v597, %v762
        %v764 = vpop.f32.mrf.mxu0
        %v765 = vadd.f32 %v597, %v764
        %766 = vmatmul.bf16.gmra.mxu0 %v545
        %v767 = vpop.f32.mrf.mxu0
        %v768 = vadd.f32 %v597, %v767
        %v769 = vpop.f32.mrf.mxu0
        %v770 = vadd.f32 %v597, %v769
        %771 = vdwg.mxu0
        %772 = vmatpush.bf16.msra.mxu0 %v710
        %773 = vmatpush.bf16.msra.mxu0 %v709
        %774 = vmatpush.bf16.msra.mxu0 %v708
        %775 = vmatpush.bf16.msra.mxu0 %v707
        %776 = vmatpush.bf16.msra.mxu0 %v706
        %777 = vmatpush.bf16.msra.mxu0 %v705
        %778 = vmatpush.bf16.msra.mxu0 %v704
        %779 = vmatpush.bf16.msra.mxu0 %v703
        %780 = vmatmul.bf16.gmra.mxu0 %v537
        %v781 = vpop.f32.mrf.mxu0
        %v782 = vadd.f32 %v753, %v781
        %v783 = vpop.f32.mrf.mxu0
        %v784 = vadd.f32 %v755, %v783
        %785 = vmatmul.bf16.gmra.mxu0 %v540
        %v786 = vpop.f32.mrf.mxu0
        %v787 = vadd.f32 %v758, %v786
        %v788 = vpop.f32.mrf.mxu0
        %v789 = vadd.f32 %v760, %v788
        %790 = vmatmul.bf16.gmra.mxu0 %v543
        %v791 = vpop.f32.mrf.mxu0
        %v792 = vadd.f32 %v763, %v791
        %v793 = vpop.f32.mrf.mxu0
        %v794 = vadd.f32 %v765, %v793
        %795 = vmatmul.bf16.gmra.mxu0 %v546
        %v796 = vpop.f32.mrf.mxu0
        %v797 = vadd.f32 %v768, %v796
        %v798 = vpop.f32.mrf.mxu0
        %v799 = vadd.f32 %v770, %v798
        %800 = vdwg.mxu0
        %801 = vmatpush.bf16.msra.mxu0 %v718
        %802 = vmatpush.bf16.msra.mxu0 %v717
        %803 = vmatpush.bf16.msra.mxu0 %v716
        %804 = vmatpush.bf16.msra.mxu0 %v715
        %805 = vmatpush.bf16.msra.mxu0 %v714
        %806 = vmatpush.bf16.msra.mxu0 %v713
        %807 = vmatpush.bf16.msra.mxu0 %v712
        %808 = vmatpush.bf16.msra.mxu0 %v711
        %809 = vmatmul.bf16.gmra.mxu0 %v538
        %v810 = vpop.f32.mrf.mxu0
        %v811 = vadd.f32 %v782, %v810
        %v812 = vpop.f32.mrf.mxu0
        %v813 = vadd.f32 %v784, %v812
        %814 = vmatmul.bf16.gmra.mxu0 %v541
        %v815 = vpop.f32.mrf.mxu0
        %v816 = vadd.f32 %v787, %v815
        %v817 = vpop.f32.mrf.mxu0
        %v818 = vadd.f32 %v789, %v817
        %819 = vmatmul.bf16.gmra.mxu0 %v544
        %v820 = vpop.f32.mrf.mxu0
        %v821 = vadd.f32 %v792, %v820
        %v822 = vpop.f32.mrf.mxu0
        %v823 = vadd.f32 %v794, %v822
        %824 = vmatmul.bf16.gmra.mxu0 %v547
        %v825 = vpop.f32.mrf.mxu0
        %v826 = vadd.f32 %v797, %v825
        %v827 = vpop.f32.mrf.mxu0
        %v828 = vadd.f32 %v799, %v827
        %829 = vdwg.mxu0
        %s830 = scalar_lea.vmem [#allocation3], 24
        %v831 = vld [vmem:[%s830] sm:$0xff]
        %v832 = vld [vmem:[%s830 + $0x8] sm:$0xff]
        %v833 = vld [vmem:[%s830 + $0x10] sm:$0xff]
        %v834 = vld [vmem:[%s830 + $0x18] sm:$0xff]
        %v835 = vld [vmem:[%s830 + $0x20] sm:$0xff]
        %v836 = vld [vmem:[%s830 + $0x28] sm:$0xff]
        %v837 = vld [vmem:[%s830 + $0x30] sm:$0xff]
        %v838 = vld [vmem:[%s830 + $0x38] sm:$0xff]
        %v839 = vld [vmem:[%s830 + $0x40] sm:$0xff]
        %v840 = vld [vmem:[%s830 + $0x48] sm:$0xff]
        %v841 = vld [vmem:[%s830 + $0x50] sm:$0xff]
        %v842 = vld [vmem:[%s830 + $0x58] sm:$0xff]
        %v843 = vld [vmem:[%s830 + $0x60] sm:$0xff]
        %v844 = vld [vmem:[%s830 + $0x68] sm:$0xff]
        %v845 = vld [vmem:[%s830 + $0x70] sm:$0xff]
        %v846 = vld [vmem:[%s830 + $0x78] sm:$0xff]
        %v847 = vld [vmem:[%s830 + $0x80] sm:$0xff]
        %v848 = vld [vmem:[%s830 + $0x88] sm:$0xff]
        %v849 = vld [vmem:[%s830 + $0x90] sm:$0xff]
        %v850 = vld [vmem:[%s830 + $0x98] sm:$0xff]
        %v851 = vld [vmem:[%s830 + $0xa0] sm:$0xff]
        %v852 = vld [vmem:[%s830 + $0xa8] sm:$0xff]
        %v853 = vld [vmem:[%s830 + $0xb0] sm:$0xff]
        %v854 = vld [vmem:[%s830 + $0xb8] sm:$0xff]
        %v855 = vpack.c.bf16 %v834, %v831
        %v856 = vpack.c.bf16 %v835, %v832
        %v857 = vpack.c.bf16 %v836, %v833
        %v858 = vpack.c.bf16 %v840, %v837
        %v859 = vpack.c.bf16 %v841, %v838
        %v860 = vpack.c.bf16 %v842, %v839
        %v861 = vpack.c.bf16 %v846, %v843
        %v862 = vpack.c.bf16 %v847, %v844
        %v863 = vpack.c.bf16 %v848, %v845
        %v864 = vpack.c.bf16 %v852, %v849
        %v865 = vpack.c.bf16 %v853, %v850
        %v866 = vpack.c.bf16 %v854, %v851
        %s867 = scalar_lea.vmem [#allocation9], 192
        %v868 = vld [vmem:[%s867] sm:$0xf]
        %v869 = vld [vmem:[%s867 + $0x4] sm:$0xf]
        %v870 = vld [vmem:[%s867 + $0x8] sm:$0xf]
        %v871 = vld [vmem:[%s867 + $0xc] sm:$0xf]
        %v872 = vld [vmem:[%s867 + $0x10] sm:$0xf]
        %v873 = vld [vmem:[%s867 + $0x14] sm:$0xf]
        %v874 = vld [vmem:[%s867 + $0x18] sm:$0xf]
        %v875 = vld [vmem:[%s867 + $0x1c] sm:$0xf]
        %v876 = vld [vmem:[%s867 + $0x20] sm:$0xf]
        %v877 = vld [vmem:[%s867 + $0x24] sm:$0xf]
        %v878 = vld [vmem:[%s867 + $0x28] sm:$0xf]
        %v879 = vld [vmem:[%s867 + $0x2c] sm:$0xf]
        %v880 = vld [vmem:[%s867 + $0x30] sm:$0xf]
        %v881 = vld [vmem:[%s867 + $0x34] sm:$0xf]
        %v882 = vld [vmem:[%s867 + $0x38] sm:$0xf]
        %v883 = vld [vmem:[%s867 + $0x3c] sm:$0xf]
        %v884 = vld [vmem:[%s867 + $0x40] sm:$0xf]
        %v885 = vld [vmem:[%s867 + $0x44] sm:$0xf]
        %v886 = vld [vmem:[%s867 + $0x48] sm:$0xf]
        %v887 = vld [vmem:[%s867 + $0x4c] sm:$0xf]
        %v888 = vld [vmem:[%s867 + $0x50] sm:$0xf]
        %v889 = vld [vmem:[%s867 + $0x54] sm:$0xf]
        %v890 = vld [vmem:[%s867 + $0x58] sm:$0xf]
        %v891 = vld [vmem:[%s867 + $0x5c] sm:$0xf]
        %v892 = vld [vmem:[%s867 + $0x60] sm:$0xf]
        %v893 = vld [vmem:[%s867 + $0x64] sm:$0xf]
        %v894 = vld [vmem:[%s867 + $0x68] sm:$0xf]
        %v895 = vld [vmem:[%s867 + $0x6c] sm:$0xf]
        %v896 = vld [vmem:[%s867 + $0x70] sm:$0xf]
        %v897 = vld [vmem:[%s867 + $0x74] sm:$0xf]
        %v898 = vld [vmem:[%s867 + $0x78] sm:$0xf]
        %v899 = vld [vmem:[%s867 + $0x7c] sm:$0xf]
        %v900 = vld [vmem:[%s867 + $0x80] sm:$0xf]
        %v901 = vld [vmem:[%s867 + $0x84] sm:$0xf]
        %v902 = vld [vmem:[%s867 + $0x88] sm:$0xf]
        %v903 = vld [vmem:[%s867 + $0x8c] sm:$0xf]
        %v904 = vld [vmem:[%s867 + $0x90] sm:$0xf]
        %v905 = vld [vmem:[%s867 + $0x94] sm:$0xf]
        %v906 = vld [vmem:[%s867 + $0x98] sm:$0xf]
        %v907 = vld [vmem:[%s867 + $0x9c] sm:$0xf]
        %v908 = vld [vmem:[%s867 + $0xa0] sm:$0xf]
        %v909 = vld [vmem:[%s867 + $0xa4] sm:$0xf]
        %v910 = vld [vmem:[%s867 + $0xa8] sm:$0xf]
        %v911 = vld [vmem:[%s867 + $0xac] sm:$0xf]
        %v912 = vld [vmem:[%s867 + $0xb0] sm:$0xf]
        %v913 = vld [vmem:[%s867 + $0xb4] sm:$0xf]
        %v914 = vld [vmem:[%s867 + $0xb8] sm:$0xf]
        %v915 = vld [vmem:[%s867 + $0xbc] sm:$0xf]
        %v964 = vunpack.c.l.b16 %v868
        %v965 = vunpack.c.l.b16 %v869
        %v966 = vunpack.c.l.b16 %v870
        %v967 = vunpack.c.l.b16 %v871
        %v968 = vunpack.c.l.b16 %v872
        %v969 = vunpack.c.l.b16 %v873
        %v970 = vunpack.c.l.b16 %v874
        %v971 = vunpack.c.l.b16 %v875
        %v972 = vunpack.c.l.b16 %v876
        %v973 = vunpack.c.l.b16 %v877
        %v974 = vunpack.c.l.b16 %v878
        %v975 = vunpack.c.l.b16 %v879
        %v976 = vunpack.c.l.b16 %v880
        %v977 = vunpack.c.l.b16 %v881
        %v978 = vunpack.c.l.b16 %v882
        %v979 = vunpack.c.l.b16 %v883
        %v980 = vunpack.c.l.b16 %v884
        %v981 = vunpack.c.l.b16 %v885
        %v982 = vunpack.c.l.b16 %v886
        %v983 = vunpack.c.l.b16 %v887
        %v984 = vunpack.c.l.b16 %v888
        %v985 = vunpack.c.l.b16 %v889
        %v986 = vunpack.c.l.b16 %v890
        %v987 = vunpack.c.l.b16 %v891
        %v988 = vunpack.c.l.b16 %v892
        %v989 = vunpack.c.l.b16 %v893
        %v990 = vunpack.c.l.b16 %v894
        %v991 = vunpack.c.l.b16 %v895
        %v992 = vunpack.c.l.b16 %v896
        %v993 = vunpack.c.l.b16 %v897
        %v994 = vunpack.c.l.b16 %v898
        %v995 = vunpack.c.l.b16 %v899
        %v996 = vunpack.c.l.b16 %v900
        %v997 = vunpack.c.l.b16 %v901
        %v998 = vunpack.c.l.b16 %v902
        %v999 = vunpack.c.l.b16 %v903
        %v1000 = vunpack.c.l.b16 %v904
        %v1001 = vunpack.c.l.b16 %v905
        %v1002 = vunpack.c.l.b16 %v906
        %v1003 = vunpack.c.l.b16 %v907
        %v1004 = vunpack.c.l.b16 %v908
        %v1005 = vunpack.c.l.b16 %v909
        %v1006 = vunpack.c.l.b16 %v910
        %v1007 = vunpack.c.l.b16 %v911
        %v1008 = vunpack.c.l.b16 %v912
        %v1009 = vunpack.c.l.b16 %v913
        %v1010 = vunpack.c.l.b16 %v914
        %v1011 = vunpack.c.l.b16 %v915
        %v1012 = vpack.c.b16 %v965, %v964
        %v1013 = vpack.c.b16 %v967, %v966
        %v1014 = vpack.c.b16 %v969, %v968
        %v1015 = vpack.c.b16 %v971, %v970
        %v1016 = vpack.c.b16 %v973, %v972
        %v1017 = vpack.c.b16 %v975, %v974
        %v1018 = vpack.c.b16 %v977, %v976
        %v1019 = vpack.c.b16 %v979, %v978
        %v1020 = vpack.c.b16 %v981, %v980
        %v1021 = vpack.c.b16 %v983, %v982
        %v1022 = vpack.c.b16 %v985, %v984
        %v1023 = vpack.c.b16 %v987, %v986
        %v1024 = vpack.c.b16 %v989, %v988
        %v1025 = vpack.c.b16 %v991, %v990
        %v1026 = vpack.c.b16 %v993, %v992
        %v1027 = vpack.c.b16 %v995, %v994
        %v1028 = vpack.c.b16 %v997, %v996
        %v1029 = vpack.c.b16 %v999, %v998
        %v1030 = vpack.c.b16 %v1001, %v1000
        %v1031 = vpack.c.b16 %v1003, %v1002
        %v1032 = vpack.c.b16 %v1005, %v1004
        %v1033 = vpack.c.b16 %v1007, %v1006
        %v1034 = vpack.c.b16 %v1009, %v1008
        %v1035 = vpack.c.b16 %v1011, %v1010
        %1060 = vmatpush.bf16.msra.mxu0 %v1019
        %1061 = vmatpush.bf16.msra.mxu0 %v1018
        %1062 = vmatpush.bf16.msra.mxu0 %v1017
        %1063 = vmatpush.bf16.msra.mxu0 %v1016
        %1064 = vmatpush.bf16.msra.mxu0 %v1015
        %1065 = vmatpush.bf16.msra.mxu0 %v1014
        %1066 = vmatpush.bf16.msra.mxu0 %v1013
        %1067 = vmatpush.bf16.msra.mxu0 %v1012
        %1068 = vmatmul.bf16.gmra.mxu0 %v855
        %v1069 = vpop.f32.mrf.mxu0
        %v1070 = vadd.f32 0.0, %v1069
        %v1071 = vpop.f32.mrf.mxu0
        %v1072 = vadd.f32 0.0, %v1071
        %1073 = vmatmul.bf16.gmra.mxu0 %v858
        %v1074 = vpop.f32.mrf.mxu0
        %v1075 = vadd.f32 0.0, %v1074
        %v1076 = vpop.f32.mrf.mxu0
        %v1077 = vadd.f32 0.0, %v1076
        %1078 = vmatmul.bf16.gmra.mxu0 %v861
        %v1079 = vpop.f32.mrf.mxu0
        %v1080 = vadd.f32 0.0, %v1079
        %v1081 = vpop.f32.mrf.mxu0
        %v1082 = vadd.f32 0.0, %v1081
        %1083 = vmatmul.bf16.gmra.mxu0 %v864
        %v1084 = vpop.f32.mrf.mxu0
        %v1085 = vadd.f32 0.0, %v1084
        %v1086 = vpop.f32.mrf.mxu0
        %v1087 = vadd.f32 0.0, %v1086
        %1088 = vdwg.mxu0
        %1089 = vmatpush.bf16.msra.mxu0 %v1027
        %1090 = vmatpush.bf16.msra.mxu0 %v1026
        %1091 = vmatpush.bf16.msra.mxu0 %v1025
        %1092 = vmatpush.bf16.msra.mxu0 %v1024
        %1093 = vmatpush.bf16.msra.mxu0 %v1023
        %1094 = vmatpush.bf16.msra.mxu0 %v1022
        %1095 = vmatpush.bf16.msra.mxu0 %v1021
        %1096 = vmatpush.bf16.msra.mxu0 %v1020
        %1097 = vmatmul.bf16.gmra.mxu0 %v856
        %v1098 = vpop.f32.mrf.mxu0
        %v1099 = vadd.f32 %v1070, %v1098
        %v1100 = vpop.f32.mrf.mxu0
        %v1101 = vadd.f32 %v1072, %v1100
        %1102 = vmatmul.bf16.gmra.mxu0 %v859
        %v1103 = vpop.f32.mrf.mxu0
        %v1104 = vadd.f32 %v1075, %v1103
        %v1105 = vpop.f32.mrf.mxu0
        %v1106 = vadd.f32 %v1077, %v1105
        %1107 = vmatmul.bf16.gmra.mxu0 %v862
        %v1108 = vpop.f32.mrf.mxu0
        %v1109 = vadd.f32 %v1080, %v1108
        %v1110 = vpop.f32.mrf.mxu0
        %v1111 = vadd.f32 %v1082, %v1110
        %1112 = vmatmul.bf16.gmra.mxu0 %v865
        %v1113 = vpop.f32.mrf.mxu0
        %v1114 = vadd.f32 %v1085, %v1113
        %v1115 = vpop.f32.mrf.mxu0
        %v1116 = vadd.f32 %v1087, %v1115
        %1117 = vdwg.mxu0
        %1118 = vmatpush.bf16.msra.mxu0 %v1035
        %1119 = vmatpush.bf16.msra.mxu0 %v1034
        %1120 = vmatpush.bf16.msra.mxu0 %v1033
        %1121 = vmatpush.bf16.msra.mxu0 %v1032
        %1122 = vmatpush.bf16.msra.mxu0 %v1031
        %1123 = vmatpush.bf16.msra.mxu0 %v1030
        %1124 = vmatpush.bf16.msra.mxu0 %v1029
        %1125 = vmatpush.bf16.msra.mxu0 %v1028
        %1126 = vmatmul.bf16.gmra.mxu0 %v857
        %v1127 = vpop.f32.mrf.mxu0
        %v1128 = vadd.f32 %v1099, %v1127
        %v1129 = vpop.f32.mrf.mxu0
        %v1130 = vadd.f32 %v1101, %v1129
        %1131 = vmatmul.bf16.gmra.mxu0 %v860
        %v1132 = vpop.f32.mrf.mxu0
        %v1133 = vadd.f32 %v1104, %v1132
        %v1134 = vpop.f32.mrf.mxu0
        %v1135 = vadd.f32 %v1106, %v1134
        %1136 = vmatmul.bf16.gmra.mxu0 %v863
        %v1137 = vpop.f32.mrf.mxu0
        %v1138 = vadd.f32 %v1109, %v1137
        %v1139 = vpop.f32.mrf.mxu0
        %v1140 = vadd.f32 %v1111, %v1139
        %1141 = vmatmul.bf16.gmra.mxu0 %v866
        %v1142 = vpop.f32.mrf.mxu0
        %v1143 = vadd.f32 %v1114, %v1142
        %v1144 = vpop.f32.mrf.mxu0
        %v1145 = vadd.f32 %v1116, %v1144
        %1146 = vdwg.mxu0
        %v1147 = vadd.f32 %v811, %v1128
        %v1148 = vadd.f32 %v813, %v1130
        %v1149 = vadd.f32 %v816, %v1133
        %v1150 = vadd.f32 %v818, %v1135
        %v1151 = vadd.f32 %v821, %v1138
        %v1152 = vadd.f32 %v823, %v1140
        %v1153 = vadd.f32 %v826, %v1143
        %v1154 = vadd.f32 %v828, %v1145
        %s1155 = scalar_lea.vmem [#allocation3], 48
        %v1156 = vld [vmem:[%s1155] sm:$0xff]
        %v1157 = vld [vmem:[%s1155 + $0x8] sm:$0xff]
        %v1158 = vld [vmem:[%s1155 + $0x10] sm:$0xff]
        %v1159 = vld [vmem:[%s1155 + $0x18] sm:$0xff]
        %v1160 = vld [vmem:[%s1155 + $0x20] sm:$0xff]
        %v1161 = vld [vmem:[%s1155 + $0x28] sm:$0xff]
        %v1162 = vld [vmem:[%s1155 + $0x30] sm:$0xff]
        %v1163 = vld [vmem:[%s1155 + $0x38] sm:$0xff]
        %v1164 = vld [vmem:[%s1155 + $0x40] sm:$0xff]
        %v1165 = vld [vmem:[%s1155 + $0x48] sm:$0xff]
        %v1166 = vld [vmem:[%s1155 + $0x50] sm:$0xff]
        %v1167 = vld [vmem:[%s1155 + $0x58] sm:$0xff]
        %v1168 = vld [vmem:[%s1155 + $0x60] sm:$0xff]
        %v1169 = vld [vmem:[%s1155 + $0x68] sm:$0xff]
        %v1170 = vld [vmem:[%s1155 + $0x70] sm:$0xff]
        %v1171 = vld [vmem:[%s1155 + $0x78] sm:$0xff]
        %v1172 = vld [vmem:[%s1155 + $0x80] sm:$0xff]
        %v1173 = vld [vmem:[%s1155 + $0x88] sm:$0xff]
        %v1174 = vld [vmem:[%s1155 + $0x90] sm:$0xff]
        %v1175 = vld [vmem:[%s1155 + $0x98] sm:$0xff]
        %v1176 = vld [vmem:[%s1155 + $0xa0] sm:$0xff]
        %v1177 = vld [vmem:[%s1155 + $0xa8] sm:$0xff]
        %v1178 = vld [vmem:[%s1155 + $0xb0] sm:$0xff]
        %v1179 = vld [vmem:[%s1155 + $0xb8] sm:$0xff]
        %v1180 = vpack.c.bf16 %v1159, %v1156
        %v1181 = vpack.c.bf16 %v1160, %v1157
        %v1182 = vpack.c.bf16 %v1161, %v1158
        %v1183 = vpack.c.bf16 %v1165, %v1162
        %v1184 = vpack.c.bf16 %v1166, %v1163
        %v1185 = vpack.c.bf16 %v1167, %v1164
        %v1186 = vpack.c.bf16 %v1171, %v1168
        %v1187 = vpack.c.bf16 %v1172, %v1169
        %v1188 = vpack.c.bf16 %v1173, %v1170
        %v1189 = vpack.c.bf16 %v1177, %v1174
        %v1190 = vpack.c.bf16 %v1178, %v1175
        %v1191 = vpack.c.bf16 %v1179, %v1176
        %s1192 = scalar_lea.vmem [#allocation9], 384
        %v1193 = vld [vmem:[%s1192] sm:$0xf]
        %v1194 = vld [vmem:[%s1192 + $0x4] sm:$0xf]
        %v1195 = vld [vmem:[%s1192 + $0x8] sm:$0xf]
        %v1196 = vld [vmem:[%s1192 + $0xc] sm:$0xf]
        %v1197 = vld [vmem:[%s1192 + $0x10] sm:$0xf]
        %v1198 = vld [vmem:[%s1192 + $0x14] sm:$0xf]
        %v1199 = vld [vmem:[%s1192 + $0x18] sm:$0xf]
        %v1200 = vld [vmem:[%s1192 + $0x1c] sm:$0xf]
        %v1201 = vld [vmem:[%s1192 + $0x20] sm:$0xf]
        %v1202 = vld [vmem:[%s1192 + $0x24] sm:$0xf]
        %v1203 = vld [vmem:[%s1192 + $0x28] sm:$0xf]
        %v1204 = vld [vmem:[%s1192 + $0x2c] sm:$0xf]
        %v1205 = vld [vmem:[%s1192 + $0x30] sm:$0xf]
        %v1206 = vld [vmem:[%s1192 + $0x34] sm:$0xf]
        %v1207 = vld [vmem:[%s1192 + $0x38] sm:$0xf]
        %v1208 = vld [vmem:[%s1192 + $0x3c] sm:$0xf]
        %v1209 = vld [vmem:[%s1192 + $0x40] sm:$0xf]
        %v1210 = vld [vmem:[%s1192 + $0x44] sm:$0xf]
        %v1211 = vld [vmem:[%s1192 + $0x48] sm:$0xf]
        %v1212 = vld [vmem:[%s1192 + $0x4c] sm:$0xf]
        %v1213 = vld [vmem:[%s1192 + $0x50] sm:$0xf]
        %v1214 = vld [vmem:[%s1192 + $0x54] sm:$0xf]
        %v1215 = vld [vmem:[%s1192 + $0x58] sm:$0xf]
        %v1216 = vld [vmem:[%s1192 + $0x5c] sm:$0xf]
        %v1217 = vld [vmem:[%s1192 + $0x60] sm:$0xf]
        %v1218 = vld [vmem:[%s1192 + $0x64] sm:$0xf]
        %v1219 = vld [vmem:[%s1192 + $0x68] sm:$0xf]
        %v1220 = vld [vmem:[%s1192 + $0x6c] sm:$0xf]
        %v1221 = vld [vmem:[%s1192 + $0x70] sm:$0xf]
        %v1222 = vld [vmem:[%s1192 + $0x74] sm:$0xf]
        %v1223 = vld [vmem:[%s1192 + $0x78] sm:$0xf]
        %v1224 = vld [vmem:[%s1192 + $0x7c] sm:$0xf]
        %v1225 = vld [vmem:[%s1192 + $0x80] sm:$0xf]
        %v1226 = vld [vmem:[%s1192 + $0x84] sm:$0xf]
        %v1227 = vld [vmem:[%s1192 + $0x88] sm:$0xf]
        %v1228 = vld [vmem:[%s1192 + $0x8c] sm:$0xf]
        %v1229 = vld [vmem:[%s1192 + $0x90] sm:$0xf]
        %v1230 = vld [vmem:[%s1192 + $0x94] sm:$0xf]
        %v1231 = vld [vmem:[%s1192 + $0x98] sm:$0xf]
        %v1232 = vld [vmem:[%s1192 + $0x9c] sm:$0xf]
        %v1233 = vld [vmem:[%s1192 + $0xa0] sm:$0xf]
        %v1234 = vld [vmem:[%s1192 + $0xa4] sm:$0xf]
        %v1235 = vld [vmem:[%s1192 + $0xa8] sm:$0xf]
        %v1236 = vld [vmem:[%s1192 + $0xac] sm:$0xf]
        %v1237 = vld [vmem:[%s1192 + $0xb0] sm:$0xf]
        %v1238 = vld [vmem:[%s1192 + $0xb4] sm:$0xf]
        %v1239 = vld [vmem:[%s1192 + $0xb8] sm:$0xf]
        %v1240 = vld [vmem:[%s1192 + $0xbc] sm:$0xf]
        %v1289 = vunpack.c.l.b16 %v1193
        %v1290 = vunpack.c.l.b16 %v1194
        %v1291 = vunpack.c.l.b16 %v1195
        %v1292 = vunpack.c.l.b16 %v1196
        %v1293 = vunpack.c.l.b16 %v1197
        %v1294 = vunpack.c.l.b16 %v1198
        %v1295 = vunpack.c.l.b16 %v1199
        %v1296 = vunpack.c.l.b16 %v1200
        %v1297 = vunpack.c.l.b16 %v1201
        %v1298 = vunpack.c.l.b16 %v1202
        %v1299 = vunpack.c.l.b16 %v1203
        %v1300 = vunpack.c.l.b16 %v1204
        %v1301 = vunpack.c.l.b16 %v1205
        %v1302 = vunpack.c.l.b16 %v1206
        %v1303 = vunpack.c.l.b16 %v1207
        %v1304 = vunpack.c.l.b16 %v1208
        %v1305 = vunpack.c.l.b16 %v1209
        %v1306 = vunpack.c.l.b16 %v1210
        %v1307 = vunpack.c.l.b16 %v1211
        %v1308 = vunpack.c.l.b16 %v1212
        %v1309 = vunpack.c.l.b16 %v1213
        %v1310 = vunpack.c.l.b16 %v1214
        %v1311 = vunpack.c.l.b16 %v1215
        %v1312 = vunpack.c.l.b16 %v1216
        %v1313 = vunpack.c.l.b16 %v1217
        %v1314 = vunpack.c.l.b16 %v1218
        %v1315 = vunpack.c.l.b16 %v1219
        %v1316 = vunpack.c.l.b16 %v1220
        %v1317 = vunpack.c.l.b16 %v1221
        %v1318 = vunpack.c.l.b16 %v1222
        %v1319 = vunpack.c.l.b16 %v1223
        %v1320 = vunpack.c.l.b16 %v1224
        %v1321 = vunpack.c.l.b16 %v1225
        %v1322 = vunpack.c.l.b16 %v1226
        %v1323 = vunpack.c.l.b16 %v1227
        %v1324 = vunpack.c.l.b16 %v1228
        %v1325 = vunpack.c.l.b16 %v1229
        %v1326 = vunpack.c.l.b16 %v1230
        %v1327 = vunpack.c.l.b16 %v1231
        %v1328 = vunpack.c.l.b16 %v1232
        %v1329 = vunpack.c.l.b16 %v1233
        %v1330 = vunpack.c.l.b16 %v1234
        %v1331 = vunpack.c.l.b16 %v1235
        %v1332 = vunpack.c.l.b16 %v1236
        %v1333 = vunpack.c.l.b16 %v1237
        %v1334 = vunpack.c.l.b16 %v1238
        %v1335 = vunpack.c.l.b16 %v1239
        %v1336 = vunpack.c.l.b16 %v1240
        %v1337 = vpack.c.b16 %v1290, %v1289
        %v1338 = vpack.c.b16 %v1292, %v1291
        %v1339 = vpack.c.b16 %v1294, %v1293
        %v1340 = vpack.c.b16 %v1296, %v1295
        %v1341 = vpack.c.b16 %v1298, %v1297
        %v1342 = vpack.c.b16 %v1300, %v1299
        %v1343 = vpack.c.b16 %v1302, %v1301
        %v1344 = vpack.c.b16 %v1304, %v1303
        %v1345 = vpack.c.b16 %v1306, %v1305
        %v1346 = vpack.c.b16 %v1308, %v1307
        %v1347 = vpack.c.b16 %v1310, %v1309
        %v1348 = vpack.c.b16 %v1312, %v1311
        %v1349 = vpack.c.b16 %v1314, %v1313
        %v1350 = vpack.c.b16 %v1316, %v1315
        %v1351 = vpack.c.b16 %v1318, %v1317
        %v1352 = vpack.c.b16 %v1320, %v1319
        %v1353 = vpack.c.b16 %v1322, %v1321
        %v1354 = vpack.c.b16 %v1324, %v1323
        %v1355 = vpack.c.b16 %v1326, %v1325
        %v1356 = vpack.c.b16 %v1328, %v1327
        %v1357 = vpack.c.b16 %v1330, %v1329
        %v1358 = vpack.c.b16 %v1332, %v1331
        %v1359 = vpack.c.b16 %v1334, %v1333
        %v1360 = vpack.c.b16 %v1336, %v1335
        %1385 = vmatpush.bf16.msra.mxu0 %v1344
        %1386 = vmatpush.bf16.msra.mxu0 %v1343
        %1387 = vmatpush.bf16.msra.mxu0 %v1342
        %1388 = vmatpush.bf16.msra.mxu0 %v1341
        %1389 = vmatpush.bf16.msra.mxu0 %v1340
        %1390 = vmatpush.bf16.msra.mxu0 %v1339
        %1391 = vmatpush.bf16.msra.mxu0 %v1338
        %1392 = vmatpush.bf16.msra.mxu0 %v1337
        %1393 = vmatmul.bf16.gmra.mxu0 %v1180
        %v1394 = vpop.f32.mrf.mxu0
        %v1395 = vadd.f32 0.0, %v1394
        %v1396 = vpop.f32.mrf.mxu0
        %v1397 = vadd.f32 0.0, %v1396
        %1398 = vmatmul.bf16.gmra.mxu0 %v1183
        %v1399 = vpop.f32.mrf.mxu0
        %v1400 = vadd.f32 0.0, %v1399
        %v1401 = vpop.f32.mrf.mxu0
        %v1402 = vadd.f32 0.0, %v1401
        %1403 = vmatmul.bf16.gmra.mxu0 %v1186
        %v1404 = vpop.f32.mrf.mxu0
        %v1405 = vadd.f32 0.0, %v1404
        %v1406 = vpop.f32.mrf.mxu0
        %v1407 = vadd.f32 0.0, %v1406
        %1408 = vmatmul.bf16.gmra.mxu0 %v1189
        %v1409 = vpop.f32.mrf.mxu0
        %v1410 = vadd.f32 0.0, %v1409
        %v1411 = vpop.f32.mrf.mxu0
        %v1412 = vadd.f32 0.0, %v1411
        %1413 = vdwg.mxu0
        %1414 = vmatpush.bf16.msra.mxu0 %v1352
        %1415 = vmatpush.bf16.msra.mxu0 %v1351
        %1416 = vmatpush.bf16.msra.mxu0 %v1350
        %1417 = vmatpush.bf16.msra.mxu0 %v1349
        %1418 = vmatpush.bf16.msra.mxu0 %v1348
        %1419 = vmatpush.bf16.msra.mxu0 %v1347
        %1420 = vmatpush.bf16.msra.mxu0 %v1346
        %1421 = vmatpush.bf16.msra.mxu0 %v1345
        %1422 = vmatmul.bf16.gmra.mxu0 %v1181
        %v1423 = vpop.f32.mrf.mxu0
        %v1424 = vadd.f32 %v1395, %v1423
        %v1425 = vpop.f32.mrf.mxu0
        %v1426 = vadd.f32 %v1397, %v1425
        %1427 = vmatmul.bf16.gmra.mxu0 %v1184
        %v1428 = vpop.f32.mrf.mxu0
        %v1429 = vadd.f32 %v1400, %v1428
        %v1430 = vpop.f32.mrf.mxu0
        %v1431 = vadd.f32 %v1402, %v1430
        %1432 = vmatmul.bf16.gmra.mxu0 %v1187
        %v1433 = vpop.f32.mrf.mxu0
        %v1434 = vadd.f32 %v1405, %v1433
        %v1435 = vpop.f32.mrf.mxu0
        %v1436 = vadd.f32 %v1407, %v1435
        %1437 = vmatmul.bf16.gmra.mxu0 %v1190
        %v1438 = vpop.f32.mrf.mxu0
        %v1439 = vadd.f32 %v1410, %v1438
        %v1440 = vpop.f32.mrf.mxu0
        %v1441 = vadd.f32 %v1412, %v1440
        %1442 = vdwg.mxu0
        %1443 = vmatpush.bf16.msra.mxu0 %v1360
        %1444 = vmatpush.bf16.msra.mxu0 %v1359
        %1445 = vmatpush.bf16.msra.mxu0 %v1358
        %1446 = vmatpush.bf16.msra.mxu0 %v1357
        %1447 = vmatpush.bf16.msra.mxu0 %v1356
        %1448 = vmatpush.bf16.msra.mxu0 %v1355
        %1449 = vmatpush.bf16.msra.mxu0 %v1354
        %1450 = vmatpush.bf16.msra.mxu0 %v1353
        %1451 = vmatmul.bf16.gmra.mxu0 %v1182
        %v1452 = vpop.f32.mrf.mxu0
        %v1453 = vadd.f32 %v1424, %v1452
        %v1454 = vpop.f32.mrf.mxu0
        %v1455 = vadd.f32 %v1426, %v1454
        %1456 = vmatmul.bf16.gmra.mxu0 %v1185
        %v1457 = vpop.f32.mrf.mxu0
        %v1458 = vadd.f32 %v1429, %v1457
        %v1459 = vpop.f32.mrf.mxu0
        %v1460 = vadd.f32 %v1431, %v1459
        %1461 = vmatmul.bf16.gmra.mxu0 %v1188
        %v1462 = vpop.f32.mrf.mxu0
        %v1463 = vadd.f32 %v1434, %v1462
        %v1464 = vpop.f32.mrf.mxu0
        %v1465 = vadd.f32 %v1436, %v1464
        %1466 = vmatmul.bf16.gmra.mxu0 %v1191
        %v1467 = vpop.f32.mrf.mxu0
        %v1468 = vadd.f32 %v1439, %v1467
        %v1469 = vpop.f32.mrf.mxu0
        %v1470 = vadd.f32 %v1441, %v1469
        %1471 = vdwg.mxu0
        %v1472 = vadd.f32 %v1147, %v1453
        %v1473 = vadd.f32 %v1148, %v1455
        %v1474 = vadd.f32 %v1149, %v1458
        %v1475 = vadd.f32 %v1150, %v1460
        %v1476 = vadd.f32 %v1151, %v1463
        %v1477 = vadd.f32 %v1152, %v1465
        %v1478 = vadd.f32 %v1153, %v1468
        %v1479 = vadd.f32 %v1154, %v1470
        %1480 = vst [vmem:[%s315] sm:$0xff] %v1472
        %1481 = vst [vmem:[%s315 + $0x8] sm:$0xff] %v1473
        %1482 = vst [vmem:[%s315 + $0x10] sm:$0xff] %v1474
        %1483 = vst [vmem:[%s315 + $0x18] sm:$0xff] %v1475
        %1484 = vst [vmem:[%s315 + $0x20] sm:$0xff] %v1476
        %1485 = vst [vmem:[%s315 + $0x28] sm:$0xff] %v1477
        %1486 = vst [vmem:[%s315 + $0x30] sm:$0xff] %v1478
        %1487 = vst [vmem:[%s315 + $0x38] sm:$0xff] %v1479
        %s1488 = sand.u32 %s146, 1
        %s1489 = scalar_lea.sflag [#allocation6], %s1488
        %s1490 = sand.u32 %s146, 1
        %s1491 = smul.addr %s1490, 64
        %s1492 = scalar_lea.vmem [#allocation10], %s1491
        %s1493 = sand.u32 %s172, 1
        %s1494 = scalar_lea.sflag [#allocation12], %s1493
        %s1495 = sand.u32 %s172, 1
        %s1496 = smul.addr %s1495, 64
        %s1497 = scalar_lea.vmem [#allocation11], %s1496
        // Predicated region
        $region53: #{tpu_custom_call.1} parent=39 // pred_check
          %p1498 = pneg %p156
        $region54: #{tpu_custom_call.1} parent=39 // pred_check_branch
          %1500 = sbr.rel (%p1498) target = $region56
        $region55: #{tpu_custom_call.1} parent=39 // pred_region
          %1502 = vsyncadd %s1489, 0
          %s1503 = smul.addr %s28, 8
          %s1504 = smul.addr %s1503, 8
          %s1505 = scalar_lea.hbm %s5, %s1504
          %s1506 = sshll.u32 %s1492, 4
          %s1507 = int_to_ptr.vmem [resolvable:$true] %s1506
          %s1508 = sshll.u32 %s1505, 4
          %s1509 = int_to_ptr.hbm [resolvable:$true] %s1508
          %1514 = dma.vmem_to_hbm [thread:$0]  %s1507, 1024, %s1509, %s1489, 128, 128, 8
        $region56: #{tpu_custom_call.1} parent=39 // pred_fallthru
          _
        // Predicated region
        $region57: #{tpu_custom_call.1} parent=39 // pred_check
          %p1515 = pneg %p182
        $region58: #{tpu_custom_call.1} parent=39 // pred_check_branch
          %1517 = sbr.rel (%p1515) target = $region60
        $region59: #{tpu_custom_call.1} parent=39 // pred_region
          %1519 = vsyncadd %s1494, 0
          %s1520 = smul.addr %s28, 8
          %s1521 = smul.addr %s1520, 8
          %s1522 = scalar_lea.hbm %s6, %s1521
          %s1523 = sshll.u32 %s1497, 4
          %s1524 = int_to_ptr.vmem [resolvable:$true] %s1523
          %s1525 = sshll.u32 %s1522, 4
          %s1526 = int_to_ptr.hbm [resolvable:$true] %s1525
          %1531 = dma.vmem_to_hbm [thread:$0]  %s1524, 1024, %s1526, %s1494, 128, 128, 8
        $region60: #{tpu_custom_call.1} parent=39 // pred_fallthru
          _
      $region40: #{tpu_custom_call.1} parent=5 // pred_fallthru
        _
      %p1532 = scmp.le.s32.totalorder 2, %s23
      // Predicated region
      $region61: #{tpu_custom_call.1} parent=5 // pred_check
        %p1533 = pneg %p1532
      $region62: #{tpu_custom_call.1} parent=5 // pred_check_branch
        %1535 = sbr.rel (%p1533) target = $region64
      $region63: #{tpu_custom_call.1} parent=5 // pred_region
        %s1536 = ssub.s32 %s23, 2
        // Predicated region
        $region65: #{tpu_custom_call.1} parent=63 // pred_check
          %p1537 = pneg %p162
        $region66: #{tpu_custom_call.1} parent=63 // pred_check_branch
          %1539 = sbr.rel (%p1537) target = $region68
        $region67: #{tpu_custom_call.1} parent=63 // pred_region
          %s1540 = sand.u32 %s147, 1
          %s1541 = scalar_lea.sflag [#allocation6], %s1540
          %s1542 = sand.u32 %s147, 1
          %s1543 = smul.addr %s1542, 64
          %s1544 = scalar_lea.vmem [#allocation10], %s1543
          %1546 = dma.done %s1541, 1024
        $region68: #{tpu_custom_call.1} parent=63 // pred_fallthru
          _
        // Predicated region
        $region69: #{tpu_custom_call.1} parent=63 // pred_check
          %p1547 = pneg %p188
        $region70: #{tpu_custom_call.1} parent=63 // pred_check_branch
          %1549 = sbr.rel (%p1547) target = $region72
        $region71: #{tpu_custom_call.1} parent=63 // pred_region
          %s1550 = sand.u32 %s173, 1
          %s1551 = scalar_lea.sflag [#allocation12], %s1550
          %s1552 = sand.u32 %s173, 1
          %s1553 = smul.addr %s1552, 64
          %s1554 = scalar_lea.vmem [#allocation11], %s1553
          %1556 = dma.done %s1551, 1024
        $region72: #{tpu_custom_call.1} parent=63 // pred_fallthru
          _
      $region64: #{tpu_custom_call.1} parent=5 // pred_fallthru
        _
    $region6: #{tpu_custom_call.1} parent=1 // loop_footer
      %s27 = sadd.s32 1, %s23
    $region7: #{tpu_custom_call.1} parent=1 // loop_footer_branch
      %22 = sbr.rel target = $region3
    $region8: #{tpu_custom_call.1} parent=1 // loop_exit
      _
    %1557 = vsyncpa [#allocation5], 1
    %s1558 = scalar_lea.sflag [#allocation5], 1
    %1559 = vsyncpa %s1558, 1
    %1560 = vsyncpa [#allocation8], 1
    %1561 = vsyncpa [#allocation6], 1
    %s1562 = scalar_lea.sflag [#allocation6], 1
    %1563 = vsyncpa %s1562, 1
    %1564 = vsyncpa [#allocation12], 1
    %s1565 = scalar_lea.sflag [#allocation12], 1
    %1566 = vsyncpa %s1565, 1

</llo_original>
